<compile_context>
chip_gen: v7x
topology: tpu7x:2x2x1
jax: 0.10.0
libtpu: 0.0.40
codegen_flags: <defaults>
</compile_context>

<pallas_src>
import jax
import jax.numpy as jnp
from jax.experimental import pallas as pl
from jax.experimental.pallas import tpu as pltpu

INPUT_DIM = 6
# (fan_in, fan_out): encoder 6->8->4->2, decoder 2->4->8->6, ReLU after all but the last
LAYER_DIMS = [(INPUT_DIM, 8), (8, 4), (4, 2), (2, 4), (4, 8), (8, INPUT_DIM)]
N_PARAMS = sum(fi * fo + fo for fi, fo in LAYER_DIMS)  # 208 floats

LANES = 128   # hardware lane width
TB = 4096     # batch elements per grid step (multiple of 128); sweep 1024-8192 per chip


def autoencoder_kernel(params_ref, x_ref, o_ref):
    # params_ref : SMEM f32[208]  -- packed [W1,b1,...,W6,b6], W in torch (out,in) order
    # x_ref/o_ref: VMEM (INPUT_DIM, tb_s, 128) -- batch mapped to (sublane, lane), dense
    x = x_ref[...].astype(jnp.float32)
    h = [x[k] for k in range(INPUT_DIM)]           # list of dense (tb_s, 128) slabs
    off = 0
    n_layers = len(LAYER_DIMS)
    for li, (fi, fo) in enumerate(LAYER_DIMS):
        w_off = off
        b_off = off + fi * fo
        off = b_off + fo
        is_last = li == n_layers - 1
        new_h = []
        for j in range(fo):                        # fully unrolled: dims are tiny constants
            # scalar-broadcast multiply-add chain on the VPU
            acc = params_ref[w_off + j * fi] * h[0]
            for k in range(1, fi):
                acc = acc + params_ref[w_off + j * fi + k] * h[k]
            acc = acc + params_ref[b_off + j]      # bias
            if is_last:
                o_ref[j, :, :] = acc.astype(o_ref.dtype)
            else:
                new_h.append(jnp.maximum(acc, 0.0))
        h = new_h


def init_params(key):
    """PyTorch-like uniform(-1/sqrt(fan_in), +) init; weights in torch (out, in) layout."""
    weights, biases = [], []
    for i, (fan_in, fan_out) in enumerate(LAYER_DIMS):
        kw, kb = jax.random.split(jax.random.fold_in(key, i))
        bound = 1.0 / jnp.sqrt(jnp.float32(fan_in))
        weights.append(jax.random.uniform(kw, (fan_out, fan_in), jnp.float32, -bound, bound))
        biases.append(jax.random.uniform(kb, (fan_out,), jnp.float32, -bound, bound))
    return weights, biases


def pack_params(weights, biases):
    """One flat f32 slab: [W1 (row-major out,in), b1, W2, b2, ...]; SMEM-resident in kernel."""
    flat = []
    for w, b in zip(weights, biases):
        flat.append(w.reshape(-1))
        flat.append(b.reshape(-1))
    packed = jnp.concatenate(flat)
    assert packed.shape == (N_PARAMS,)
    return packed


@jax.jit
def improved_autoencoder(x, packed_params):
    B, F = x.shape
    assert F == INPUT_DIM
    # Lane-align the batch (<=127 pad rows, fused with the one-time transpose). The
    # TB-level raggedness is handled by cdiv + Pallas partial-block masking, not padding.
    Bp = ((B + LANES - 1) // LANES) * LANES
    x_t = jnp.pad(x, ((0, Bp - B), (0, 0))).T                  # (F, Bp): lane-dense layout
    x_t3 = x_t.reshape(INPUT_DIM, Bp // LANES, LANES)          # free reshape (metadata only)

    n_lane_tiles = Bp // LANES
    tb_s = min(TB // LANES, n_lane_tiles)   # sublane-tiles per step: mult. of 8 or full dim
    grid = (pl.cdiv(n_lane_tiles, tb_s),)

    block = (INPUT_DIM, tb_s, LANES)
    out = pl.pallas_call(
        autoencoder_kernel,
        out_shape=jax.ShapeDtypeStruct((INPUT_DIM, n_lane_tiles, LANES), x.dtype),
        grid_spec=pltpu.PrefetchScalarGridSpec(
            num_scalar_prefetch=0,
            grid=grid,
            in_specs=[
                pl.BlockSpec(memory_space=pltpu.MemorySpace.SMEM),  # packed params, resident
                pl.BlockSpec(block, lambda i: (0, i, 0)),           # x batch tile
            ],
            out_specs=pl.BlockSpec(block, lambda i: (0, i, 0)),
        ),
        compiler_params=pltpu.CompilerParams(
            dimension_semantics=("parallel",),  # lets v7x shard batch tiles over its 2 TCs
        ),
    )(packed_params, x_t3)

    return out.reshape(INPUT_DIM, Bp)[:, :B].T                 # back to (B, F)


if __name__ == "__main__":
    key = jax.random.PRNGKey(0)
    k_x, k_p = jax.random.split(key)
    batch = 2
    x = jax.random.normal(k_x, (batch, INPUT_DIM), jnp.float32)
    weights, biases = init_params(k_p)
    packed = pack_params(weights, biases)

    y = improved_autoencoder(x, packed)
    jax.block_until_ready(y)

    # pure-JAX reference (PyTorch semantics: h @ W.T + b, ReLU after all but last layer)
    h = x
    for li, (w, b) in enumerate(zip(weights, biases)):
        h = h @ w.T + b
        if li < len(LAYER_DIMS) - 1:
            h = jnp.maximum(h, 0.0)
    assert y.shape == (batch, INPUT_DIM)
    assert jnp.allclose(y, h, atol=1e-5), "mismatch vs reference"
    print("KERNEL_OK")
</pallas_src>

<mosaic_0001>
module attributes {stable_mosaic.version = 11 : i64} {
  func.func @autoencoder_kernel(%arg0: i32, %arg1: memref<208xf32, #tpu.memory_space<smem>>, %arg2: memref<6x1x128xf32, #tpu.memory_space<vmem>>, %arg3: memref<6x1x128xf32, #tpu.memory_space<vmem>>) attributes {dimension_semantics = [#tpu.dimension_semantics<parallel>], iteration_bounds = array<i64: 1>, scalar_prefetch = 0 : i64, scratch_operands = 0 : i64, tpu.core_type = #tpu.core_type<tc>, window_params = [{transform_indices = @transform_0, window_bounds = array<i64: 208>}, {transform_indices = @transform_1, window_bounds = array<i64: 6, 1, 128>}, {transform_indices = @transform_2, window_bounds = array<i64: 6, 1, 128>}]} {
    %c0 = arith.constant 0 : index
    %c0_0 = arith.constant 0 : index
    %c0_1 = arith.constant 0 : index
    %0 = vector.load %arg2[%c0, %c0_0, %c0_1] : memref<6x1x128xf32, #tpu.memory_space<vmem>>, vector<6x1x128xf32>
    %1 = vector.extract_strided_slice %0 {offsets = [0, 0, 0], sizes = [1, 1, 128], strides = [1, 1, 1]} : vector<6x1x128xf32> to vector<1x1x128xf32>
    %2 = vector.shape_cast %1 : vector<1x1x128xf32> to vector<1x128xf32>
    %3 = vector.extract_strided_slice %0 {offsets = [1, 0, 0], sizes = [1, 1, 128], strides = [1, 1, 1]} : vector<6x1x128xf32> to vector<1x1x128xf32>
    %4 = vector.shape_cast %3 : vector<1x1x128xf32> to vector<1x128xf32>
    %5 = vector.extract_strided_slice %0 {offsets = [2, 0, 0], sizes = [1, 1, 128], strides = [1, 1, 1]} : vector<6x1x128xf32> to vector<1x1x128xf32>
    %6 = vector.shape_cast %5 : vector<1x1x128xf32> to vector<1x128xf32>
    %7 = vector.extract_strided_slice %0 {offsets = [3, 0, 0], sizes = [1, 1, 128], strides = [1, 1, 1]} : vector<6x1x128xf32> to vector<1x1x128xf32>
    %8 = vector.shape_cast %7 : vector<1x1x128xf32> to vector<1x128xf32>
    %9 = vector.extract_strided_slice %0 {offsets = [4, 0, 0], sizes = [1, 1, 128], strides = [1, 1, 1]} : vector<6x1x128xf32> to vector<1x1x128xf32>
    %10 = vector.shape_cast %9 : vector<1x1x128xf32> to vector<1x128xf32>
    %11 = vector.extract_strided_slice %0 {offsets = [5, 0, 0], sizes = [1, 1, 128], strides = [1, 1, 1]} : vector<6x1x128xf32> to vector<1x1x128xf32>
    %12 = vector.shape_cast %11 : vector<1x1x128xf32> to vector<1x128xf32>
    %c0_2 = arith.constant 0 : index
    %13 = memref.load %arg1[%c0_2] : memref<208xf32, #tpu.memory_space<smem>>
    %14 = vector.broadcast %13 : f32 to vector<1x128xf32>
    %15 = arith.mulf %14, %2 : vector<1x128xf32>
    %c1 = arith.constant 1 : index
    %16 = memref.load %arg1[%c1] : memref<208xf32, #tpu.memory_space<smem>>
    %17 = vector.broadcast %16 : f32 to vector<1x128xf32>
    %18 = arith.mulf %17, %4 : vector<1x128xf32>
    %19 = arith.addf %15, %18 : vector<1x128xf32>
    %c2 = arith.constant 2 : index
    %20 = memref.load %arg1[%c2] : memref<208xf32, #tpu.memory_space<smem>>
    %21 = vector.broadcast %20 : f32 to vector<1x128xf32>
    %22 = arith.mulf %21, %6 : vector<1x128xf32>
    %23 = arith.addf %19, %22 : vector<1x128xf32>
    %c3 = arith.constant 3 : index
    %24 = memref.load %arg1[%c3] : memref<208xf32, #tpu.memory_space<smem>>
    %25 = vector.broadcast %24 : f32 to vector<1x128xf32>
    %26 = arith.mulf %25, %8 : vector<1x128xf32>
    %27 = arith.addf %23, %26 : vector<1x128xf32>
    %c4 = arith.constant 4 : index
    %28 = memref.load %arg1[%c4] : memref<208xf32, #tpu.memory_space<smem>>
    %29 = vector.broadcast %28 : f32 to vector<1x128xf32>
    %30 = arith.mulf %29, %10 : vector<1x128xf32>
    %31 = arith.addf %27, %30 : vector<1x128xf32>
    %c5 = arith.constant 5 : index
    %32 = memref.load %arg1[%c5] : memref<208xf32, #tpu.memory_space<smem>>
    %33 = vector.broadcast %32 : f32 to vector<1x128xf32>
    %34 = arith.mulf %33, %12 : vector<1x128xf32>
    %35 = arith.addf %31, %34 : vector<1x128xf32>
    %c48 = arith.constant 48 : index
    %36 = memref.load %arg1[%c48] : memref<208xf32, #tpu.memory_space<smem>>
    %37 = vector.broadcast %36 : f32 to vector<1x128xf32>
    %38 = arith.addf %35, %37 : vector<1x128xf32>
    %cst = arith.constant 0.000000e+00 : f32
    %39 = vector.broadcast %cst : f32 to vector<1x128xf32>
    %40 = arith.maximumf %38, %39 : vector<1x128xf32>
    %c6 = arith.constant 6 : index
    %41 = memref.load %arg1[%c6] : memref<208xf32, #tpu.memory_space<smem>>
    %42 = vector.broadcast %41 : f32 to vector<1x128xf32>
    %43 = arith.mulf %42, %2 : vector<1x128xf32>
    %c7 = arith.constant 7 : index
    %44 = memref.load %arg1[%c7] : memref<208xf32, #tpu.memory_space<smem>>
    %45 = vector.broadcast %44 : f32 to vector<1x128xf32>
    %46 = arith.mulf %45, %4 : vector<1x128xf32>
    %47 = arith.addf %43, %46 : vector<1x128xf32>
    %c8 = arith.constant 8 : index
    %48 = memref.load %arg1[%c8] : memref<208xf32, #tpu.memory_space<smem>>
    %49 = vector.broadcast %48 : f32 to vector<1x128xf32>
    %50 = arith.mulf %49, %6 : vector<1x128xf32>
    %51 = arith.addf %47, %50 : vector<1x128xf32>
    %c9 = arith.constant 9 : index
    %52 = memref.load %arg1[%c9] : memref<208xf32, #tpu.memory_space<smem>>
    %53 = vector.broadcast %52 : f32 to vector<1x128xf32>
    %54 = arith.mulf %53, %8 : vector<1x128xf32>
    %55 = arith.addf %51, %54 : vector<1x128xf32>
    %c10 = arith.constant 10 : index
    %56 = memref.load %arg1[%c10] : memref<208xf32, #tpu.memory_space<smem>>
    %57 = vector.broadcast %56 : f32 to vector<1x128xf32>
    %58 = arith.mulf %57, %10 : vector<1x128xf32>
    %59 = arith.addf %55, %58 : vector<1x128xf32>
    %c11 = arith.constant 11 : index
    %60 = memref.load %arg1[%c11] : memref<208xf32, #tpu.memory_space<smem>>
    %61 = vector.broadcast %60 : f32 to vector<1x128xf32>
    %62 = arith.mulf %61, %12 : vector<1x128xf32>
    %63 = arith.addf %59, %62 : vector<1x128xf32>
    %c49 = arith.constant 49 : index
    %64 = memref.load %arg1[%c49] : memref<208xf32, #tpu.memory_space<smem>>
    %65 = vector.broadcast %64 : f32 to vector<1x128xf32>
    %66 = arith.addf %63, %65 : vector<1x128xf32>
    %cst_3 = arith.constant 0.000000e+00 : f32
    %67 = vector.broadcast %cst_3 : f32 to vector<1x128xf32>
    %68 = arith.maximumf %66, %67 : vector<1x128xf32>
    %c12 = arith.constant 12 : index
    %69 = memref.load %arg1[%c12] : memref<208xf32, #tpu.memory_space<smem>>
    %70 = vector.broadcast %69 : f32 to vector<1x128xf32>
    %71 = arith.mulf %70, %2 : vector<1x128xf32>
    %c13 = arith.constant 13 : index
    %72 = memref.load %arg1[%c13] : memref<208xf32, #tpu.memory_space<smem>>
    %73 = vector.broadcast %72 : f32 to vector<1x128xf32>
    %74 = arith.mulf %73, %4 : vector<1x128xf32>
    %75 = arith.addf %71, %74 : vector<1x128xf32>
    %c14 = arith.constant 14 : index
    %76 = memref.load %arg1[%c14] : memref<208xf32, #tpu.memory_space<smem>>
    %77 = vector.broadcast %76 : f32 to vector<1x128xf32>
    %78 = arith.mulf %77, %6 : vector<1x128xf32>
    %79 = arith.addf %75, %78 : vector<1x128xf32>
    %c15 = arith.constant 15 : index
    %80 = memref.load %arg1[%c15] : memref<208xf32, #tpu.memory_space<smem>>
    %81 = vector.broadcast %80 : f32 to vector<1x128xf32>
    %82 = arith.mulf %81, %8 : vector<1x128xf32>
    %83 = arith.addf %79, %82 : vector<1x128xf32>
    %c16 = arith.constant 16 : index
    %84 = memref.load %arg1[%c16] : memref<208xf32, #tpu.memory_space<smem>>
    %85 = vector.broadcast %84 : f32 to vector<1x128xf32>
    %86 = arith.mulf %85, %10 : vector<1x128xf32>
    %87 = arith.addf %83, %86 : vector<1x128xf32>
    %c17 = arith.constant 17 : index
    %88 = memref.load %arg1[%c17] : memref<208xf32, #tpu.memory_space<smem>>
    %89 = vector.broadcast %88 : f32 to vector<1x128xf32>
    %90 = arith.mulf %89, %12 : vector<1x128xf32>
    %91 = arith.addf %87, %90 : vector<1x128xf32>
    %c50 = arith.constant 50 : index
    %92 = memref.load %arg1[%c50] : memref<208xf32, #tpu.memory_space<smem>>
    %93 = vector.broadcast %92 : f32 to vector<1x128xf32>
    %94 = arith.addf %91, %93 : vector<1x128xf32>
    %cst_4 = arith.constant 0.000000e+00 : f32
    %95 = vector.broadcast %cst_4 : f32 to vector<1x128xf32>
    %96 = arith.maximumf %94, %95 : vector<1x128xf32>
    %c18 = arith.constant 18 : index
    %97 = memref.load %arg1[%c18] : memref<208xf32, #tpu.memory_space<smem>>
    %98 = vector.broadcast %97 : f32 to vector<1x128xf32>
    %99 = arith.mulf %98, %2 : vector<1x128xf32>
    %c19 = arith.constant 19 : index
    %100 = memref.load %arg1[%c19] : memref<208xf32, #tpu.memory_space<smem>>
    %101 = vector.broadcast %100 : f32 to vector<1x128xf32>
    %102 = arith.mulf %101, %4 : vector<1x128xf32>
    %103 = arith.addf %99, %102 : vector<1x128xf32>
    %c20 = arith.constant 20 : index
    %104 = memref.load %arg1[%c20] : memref<208xf32, #tpu.memory_space<smem>>
    %105 = vector.broadcast %104 : f32 to vector<1x128xf32>
    %106 = arith.mulf %105, %6 : vector<1x128xf32>
    %107 = arith.addf %103, %106 : vector<1x128xf32>
    %c21 = arith.constant 21 : index
    %108 = memref.load %arg1[%c21] : memref<208xf32, #tpu.memory_space<smem>>
    %109 = vector.broadcast %108 : f32 to vector<1x128xf32>
    %110 = arith.mulf %109, %8 : vector<1x128xf32>
    %111 = arith.addf %107, %110 : vector<1x128xf32>
    %c22 = arith.constant 22 : index
    %112 = memref.load %arg1[%c22] : memref<208xf32, #tpu.memory_space<smem>>
    %113 = vector.broadcast %112 : f32 to vector<1x128xf32>
    %114 = arith.mulf %113, %10 : vector<1x128xf32>
    %115 = arith.addf %111, %114 : vector<1x128xf32>
    %c23 = arith.constant 23 : index
    %116 = memref.load %arg1[%c23] : memref<208xf32, #tpu.memory_space<smem>>
    %117 = vector.broadcast %116 : f32 to vector<1x128xf32>
    %118 = arith.mulf %117, %12 : vector<1x128xf32>
    %119 = arith.addf %115, %118 : vector<1x128xf32>
    %c51 = arith.constant 51 : index
    %120 = memref.load %arg1[%c51] : memref<208xf32, #tpu.memory_space<smem>>
    %121 = vector.broadcast %120 : f32 to vector<1x128xf32>
    %122 = arith.addf %119, %121 : vector<1x128xf32>
    %cst_5 = arith.constant 0.000000e+00 : f32
    %123 = vector.broadcast %cst_5 : f32 to vector<1x128xf32>
    %124 = arith.maximumf %122, %123 : vector<1x128xf32>
    %c24 = arith.constant 24 : index
    %125 = memref.load %arg1[%c24] : memref<208xf32, #tpu.memory_space<smem>>
    %126 = vector.broadcast %125 : f32 to vector<1x128xf32>
    %127 = arith.mulf %126, %2 : vector<1x128xf32>
    %c25 = arith.constant 25 : index
    %128 = memref.load %arg1[%c25] : memref<208xf32, #tpu.memory_space<smem>>
    %129 = vector.broadcast %128 : f32 to vector<1x128xf32>
    %130 = arith.mulf %129, %4 : vector<1x128xf32>
    %131 = arith.addf %127, %130 : vector<1x128xf32>
    %c26 = arith.constant 26 : index
    %132 = memref.load %arg1[%c26] : memref<208xf32, #tpu.memory_space<smem>>
    %133 = vector.broadcast %132 : f32 to vector<1x128xf32>
    %134 = arith.mulf %133, %6 : vector<1x128xf32>
    %135 = arith.addf %131, %134 : vector<1x128xf32>
    %c27 = arith.constant 27 : index
    %136 = memref.load %arg1[%c27] : memref<208xf32, #tpu.memory_space<smem>>
    %137 = vector.broadcast %136 : f32 to vector<1x128xf32>
    %138 = arith.mulf %137, %8 : vector<1x128xf32>
    %139 = arith.addf %135, %138 : vector<1x128xf32>
    %c28 = arith.constant 28 : index
    %140 = memref.load %arg1[%c28] : memref<208xf32, #tpu.memory_space<smem>>
    %141 = vector.broadcast %140 : f32 to vector<1x128xf32>
    %142 = arith.mulf %141, %10 : vector<1x128xf32>
    %143 = arith.addf %139, %142 : vector<1x128xf32>
    %c29 = arith.constant 29 : index
    %144 = memref.load %arg1[%c29] : memref<208xf32, #tpu.memory_space<smem>>
    %145 = vector.broadcast %144 : f32 to vector<1x128xf32>
    %146 = arith.mulf %145, %12 : vector<1x128xf32>
    %147 = arith.addf %143, %146 : vector<1x128xf32>
    %c52 = arith.constant 52 : index
    %148 = memref.load %arg1[%c52] : memref<208xf32, #tpu.memory_space<smem>>
    %149 = vector.broadcast %148 : f32 to vector<1x128xf32>
    %150 = arith.addf %147, %149 : vector<1x128xf32>
    %cst_6 = arith.constant 0.000000e+00 : f32
    %151 = vector.broadcast %cst_6 : f32 to vector<1x128xf32>
    %152 = arith.maximumf %150, %151 : vector<1x128xf32>
    %c30 = arith.constant 30 : index
    %153 = memref.load %arg1[%c30] : memref<208xf32, #tpu.memory_space<smem>>
    %154 = vector.broadcast %153 : f32 to vector<1x128xf32>
    %155 = arith.mulf %154, %2 : vector<1x128xf32>
    %c31 = arith.constant 31 : index
    %156 = memref.load %arg1[%c31] : memref<208xf32, #tpu.memory_space<smem>>
    %157 = vector.broadcast %156 : f32 to vector<1x128xf32>
    %158 = arith.mulf %157, %4 : vector<1x128xf32>
    %159 = arith.addf %155, %158 : vector<1x128xf32>
    %c32 = arith.constant 32 : index
    %160 = memref.load %arg1[%c32] : memref<208xf32, #tpu.memory_space<smem>>
    %161 = vector.broadcast %160 : f32 to vector<1x128xf32>
    %162 = arith.mulf %161, %6 : vector<1x128xf32>
    %163 = arith.addf %159, %162 : vector<1x128xf32>
    %c33 = arith.constant 33 : index
    %164 = memref.load %arg1[%c33] : memref<208xf32, #tpu.memory_space<smem>>
    %165 = vector.broadcast %164 : f32 to vector<1x128xf32>
    %166 = arith.mulf %165, %8 : vector<1x128xf32>
    %167 = arith.addf %163, %166 : vector<1x128xf32>
    %c34 = arith.constant 34 : index
    %168 = memref.load %arg1[%c34] : memref<208xf32, #tpu.memory_space<smem>>
    %169 = vector.broadcast %168 : f32 to vector<1x128xf32>
    %170 = arith.mulf %169, %10 : vector<1x128xf32>
    %171 = arith.addf %167, %170 : vector<1x128xf32>
    %c35 = arith.constant 35 : index
    %172 = memref.load %arg1[%c35] : memref<208xf32, #tpu.memory_space<smem>>
    %173 = vector.broadcast %172 : f32 to vector<1x128xf32>
    %174 = arith.mulf %173, %12 : vector<1x128xf32>
    %175 = arith.addf %171, %174 : vector<1x128xf32>
    %c53 = arith.constant 53 : index
    %176 = memref.load %arg1[%c53] : memref<208xf32, #tpu.memory_space<smem>>
    %177 = vector.broadcast %176 : f32 to vector<1x128xf32>
    %178 = arith.addf %175, %177 : vector<1x128xf32>
    %cst_7 = arith.constant 0.000000e+00 : f32
    %179 = vector.broadcast %cst_7 : f32 to vector<1x128xf32>
    %180 = arith.maximumf %178, %179 : vector<1x128xf32>
    %c36 = arith.constant 36 : index
    %181 = memref.load %arg1[%c36] : memref<208xf32, #tpu.memory_space<smem>>
    %182 = vector.broadcast %181 : f32 to vector<1x128xf32>
    %183 = arith.mulf %182, %2 : vector<1x128xf32>
    %c37 = arith.constant 37 : index
    %184 = memref.load %arg1[%c37] : memref<208xf32, #tpu.memory_space<smem>>
    %185 = vector.broadcast %184 : f32 to vector<1x128xf32>
    %186 = arith.mulf %185, %4 : vector<1x128xf32>
    %187 = arith.addf %183, %186 : vector<1x128xf32>
    %c38 = arith.constant 38 : index
    %188 = memref.load %arg1[%c38] : memref<208xf32, #tpu.memory_space<smem>>
    %189 = vector.broadcast %188 : f32 to vector<1x128xf32>
    %190 = arith.mulf %189, %6 : vector<1x128xf32>
    %191 = arith.addf %187, %190 : vector<1x128xf32>
    %c39 = arith.constant 39 : index
    %192 = memref.load %arg1[%c39] : memref<208xf32, #tpu.memory_space<smem>>
    %193 = vector.broadcast %192 : f32 to vector<1x128xf32>
    %194 = arith.mulf %193, %8 : vector<1x128xf32>
    %195 = arith.addf %191, %194 : vector<1x128xf32>
    %c40 = arith.constant 40 : index
    %196 = memref.load %arg1[%c40] : memref<208xf32, #tpu.memory_space<smem>>
    %197 = vector.broadcast %196 : f32 to vector<1x128xf32>
    %198 = arith.mulf %197, %10 : vector<1x128xf32>
    %199 = arith.addf %195, %198 : vector<1x128xf32>
    %c41 = arith.constant 41 : index
    %200 = memref.load %arg1[%c41] : memref<208xf32, #tpu.memory_space<smem>>
    %201 = vector.broadcast %200 : f32 to vector<1x128xf32>
    %202 = arith.mulf %201, %12 : vector<1x128xf32>
    %203 = arith.addf %199, %202 : vector<1x128xf32>
    %c54 = arith.constant 54 : index
    %204 = memref.load %arg1[%c54] : memref<208xf32, #tpu.memory_space<smem>>
    %205 = vector.broadcast %204 : f32 to vector<1x128xf32>
    %206 = arith.addf %203, %205 : vector<1x128xf32>
    %cst_8 = arith.constant 0.000000e+00 : f32
    %207 = vector.broadcast %cst_8 : f32 to vector<1x128xf32>
    %208 = arith.maximumf %206, %207 : vector<1x128xf32>
    %c42 = arith.constant 42 : index
    %209 = memref.load %arg1[%c42] : memref<208xf32, #tpu.memory_space<smem>>
    %210 = vector.broadcast %209 : f32 to vector<1x128xf32>
    %211 = arith.mulf %210, %2 : vector<1x128xf32>
    %c43 = arith.constant 43 : index
    %212 = memref.load %arg1[%c43] : memref<208xf32, #tpu.memory_space<smem>>
    %213 = vector.broadcast %212 : f32 to vector<1x128xf32>
    %214 = arith.mulf %213, %4 : vector<1x128xf32>
    %215 = arith.addf %211, %214 : vector<1x128xf32>
    %c44 = arith.constant 44 : index
    %216 = memref.load %arg1[%c44] : memref<208xf32, #tpu.memory_space<smem>>
    %217 = vector.broadcast %216 : f32 to vector<1x128xf32>
    %218 = arith.mulf %217, %6 : vector<1x128xf32>
    %219 = arith.addf %215, %218 : vector<1x128xf32>
    %c45 = arith.constant 45 : index
    %220 = memref.load %arg1[%c45] : memref<208xf32, #tpu.memory_space<smem>>
    %221 = vector.broadcast %220 : f32 to vector<1x128xf32>
    %222 = arith.mulf %221, %8 : vector<1x128xf32>
    %223 = arith.addf %219, %222 : vector<1x128xf32>
    %c46 = arith.constant 46 : index
    %224 = memref.load %arg1[%c46] : memref<208xf32, #tpu.memory_space<smem>>
    %225 = vector.broadcast %224 : f32 to vector<1x128xf32>
    %226 = arith.mulf %225, %10 : vector<1x128xf32>
    %227 = arith.addf %223, %226 : vector<1x128xf32>
    %c47 = arith.constant 47 : index
    %228 = memref.load %arg1[%c47] : memref<208xf32, #tpu.memory_space<smem>>
    %229 = vector.broadcast %228 : f32 to vector<1x128xf32>
    %230 = arith.mulf %229, %12 : vector<1x128xf32>
    %231 = arith.addf %227, %230 : vector<1x128xf32>
    %c55 = arith.constant 55 : index
    %232 = memref.load %arg1[%c55] : memref<208xf32, #tpu.memory_space<smem>>
    %233 = vector.broadcast %232 : f32 to vector<1x128xf32>
    %234 = arith.addf %231, %233 : vector<1x128xf32>
    %cst_9 = arith.constant 0.000000e+00 : f32
    %235 = vector.broadcast %cst_9 : f32 to vector<1x128xf32>
    %236 = arith.maximumf %234, %235 : vector<1x128xf32>
    %c56 = arith.constant 56 : index
    %237 = memref.load %arg1[%c56] : memref<208xf32, #tpu.memory_space<smem>>
    %238 = vector.broadcast %237 : f32 to vector<1x128xf32>
    %239 = arith.mulf %238, %40 : vector<1x128xf32>
    %c57 = arith.constant 57 : index
    %240 = memref.load %arg1[%c57] : memref<208xf32, #tpu.memory_space<smem>>
    %241 = vector.broadcast %240 : f32 to vector<1x128xf32>
    %242 = arith.mulf %241, %68 : vector<1x128xf32>
    %243 = arith.addf %239, %242 : vector<1x128xf32>
    %c58 = arith.constant 58 : index
    %244 = memref.load %arg1[%c58] : memref<208xf32, #tpu.memory_space<smem>>
    %245 = vector.broadcast %244 : f32 to vector<1x128xf32>
    %246 = arith.mulf %245, %96 : vector<1x128xf32>
    %247 = arith.addf %243, %246 : vector<1x128xf32>
    %c59 = arith.constant 59 : index
    %248 = memref.load %arg1[%c59] : memref<208xf32, #tpu.memory_space<smem>>
    %249 = vector.broadcast %248 : f32 to vector<1x128xf32>
    %250 = arith.mulf %249, %124 : vector<1x128xf32>
    %251 = arith.addf %247, %250 : vector<1x128xf32>
    %c60 = arith.constant 60 : index
    %252 = memref.load %arg1[%c60] : memref<208xf32, #tpu.memory_space<smem>>
    %253 = vector.broadcast %252 : f32 to vector<1x128xf32>
    %254 = arith.mulf %253, %152 : vector<1x128xf32>
    %255 = arith.addf %251, %254 : vector<1x128xf32>
    %c61 = arith.constant 61 : index
    %256 = memref.load %arg1[%c61] : memref<208xf32, #tpu.memory_space<smem>>
    %257 = vector.broadcast %256 : f32 to vector<1x128xf32>
    %258 = arith.mulf %257, %180 : vector<1x128xf32>
    %259 = arith.addf %255, %258 : vector<1x128xf32>
    %c62 = arith.constant 62 : index
    %260 = memref.load %arg1[%c62] : memref<208xf32, #tpu.memory_space<smem>>
    %261 = vector.broadcast %260 : f32 to vector<1x128xf32>
    %262 = arith.mulf %261, %208 : vector<1x128xf32>
    %263 = arith.addf %259, %262 : vector<1x128xf32>
    %c63 = arith.constant 63 : index
    %264 = memref.load %arg1[%c63] : memref<208xf32, #tpu.memory_space<smem>>
    %265 = vector.broadcast %264 : f32 to vector<1x128xf32>
    %266 = arith.mulf %265, %236 : vector<1x128xf32>
    %267 = arith.addf %263, %266 : vector<1x128xf32>
    %c88 = arith.constant 88 : index
    %268 = memref.load %arg1[%c88] : memref<208xf32, #tpu.memory_space<smem>>
    %269 = vector.broadcast %268 : f32 to vector<1x128xf32>
    %270 = arith.addf %267, %269 : vector<1x128xf32>
    %cst_10 = arith.constant 0.000000e+00 : f32
    %271 = vector.broadcast %cst_10 : f32 to vector<1x128xf32>
    %272 = arith.maximumf %270, %271 : vector<1x128xf32>
    %c64 = arith.constant 64 : index
    %273 = memref.load %arg1[%c64] : memref<208xf32, #tpu.memory_space<smem>>
    %274 = vector.broadcast %273 : f32 to vector<1x128xf32>
    %275 = arith.mulf %274, %40 : vector<1x128xf32>
    %c65 = arith.constant 65 : index
    %276 = memref.load %arg1[%c65] : memref<208xf32, #tpu.memory_space<smem>>
    %277 = vector.broadcast %276 : f32 to vector<1x128xf32>
    %278 = arith.mulf %277, %68 : vector<1x128xf32>
    %279 = arith.addf %275, %278 : vector<1x128xf32>
    %c66 = arith.constant 66 : index
    %280 = memref.load %arg1[%c66] : memref<208xf32, #tpu.memory_space<smem>>
    %281 = vector.broadcast %280 : f32 to vector<1x128xf32>
    %282 = arith.mulf %281, %96 : vector<1x128xf32>
    %283 = arith.addf %279, %282 : vector<1x128xf32>
    %c67 = arith.constant 67 : index
    %284 = memref.load %arg1[%c67] : memref<208xf32, #tpu.memory_space<smem>>
    %285 = vector.broadcast %284 : f32 to vector<1x128xf32>
    %286 = arith.mulf %285, %124 : vector<1x128xf32>
    %287 = arith.addf %283, %286 : vector<1x128xf32>
    %c68 = arith.constant 68 : index
    %288 = memref.load %arg1[%c68] : memref<208xf32, #tpu.memory_space<smem>>
    %289 = vector.broadcast %288 : f32 to vector<1x128xf32>
    %290 = arith.mulf %289, %152 : vector<1x128xf32>
    %291 = arith.addf %287, %290 : vector<1x128xf32>
    %c69 = arith.constant 69 : index
    %292 = memref.load %arg1[%c69] : memref<208xf32, #tpu.memory_space<smem>>
    %293 = vector.broadcast %292 : f32 to vector<1x128xf32>
    %294 = arith.mulf %293, %180 : vector<1x128xf32>
    %295 = arith.addf %291, %294 : vector<1x128xf32>
    %c70 = arith.constant 70 : index
    %296 = memref.load %arg1[%c70] : memref<208xf32, #tpu.memory_space<smem>>
    %297 = vector.broadcast %296 : f32 to vector<1x128xf32>
    %298 = arith.mulf %297, %208 : vector<1x128xf32>
    %299 = arith.addf %295, %298 : vector<1x128xf32>
    %c71 = arith.constant 71 : index
    %300 = memref.load %arg1[%c71] : memref<208xf32, #tpu.memory_space<smem>>
    %301 = vector.broadcast %300 : f32 to vector<1x128xf32>
    %302 = arith.mulf %301, %236 : vector<1x128xf32>
    %303 = arith.addf %299, %302 : vector<1x128xf32>
    %c89 = arith.constant 89 : index
    %304 = memref.load %arg1[%c89] : memref<208xf32, #tpu.memory_space<smem>>
    %305 = vector.broadcast %304 : f32 to vector<1x128xf32>
    %306 = arith.addf %303, %305 : vector<1x128xf32>
    %cst_11 = arith.constant 0.000000e+00 : f32
    %307 = vector.broadcast %cst_11 : f32 to vector<1x128xf32>
    %308 = arith.maximumf %306, %307 : vector<1x128xf32>
    %c72 = arith.constant 72 : index
    %309 = memref.load %arg1[%c72] : memref<208xf32, #tpu.memory_space<smem>>
    %310 = vector.broadcast %309 : f32 to vector<1x128xf32>
    %311 = arith.mulf %310, %40 : vector<1x128xf32>
    %c73 = arith.constant 73 : index
    %312 = memref.load %arg1[%c73] : memref<208xf32, #tpu.memory_space<smem>>
    %313 = vector.broadcast %312 : f32 to vector<1x128xf32>
    %314 = arith.mulf %313, %68 : vector<1x128xf32>
    %315 = arith.addf %311, %314 : vector<1x128xf32>
    %c74 = arith.constant 74 : index
    %316 = memref.load %arg1[%c74] : memref<208xf32, #tpu.memory_space<smem>>
    %317 = vector.broadcast %316 : f32 to vector<1x128xf32>
    %318 = arith.mulf %317, %96 : vector<1x128xf32>
    %319 = arith.addf %315, %318 : vector<1x128xf32>
    %c75 = arith.constant 75 : index
    %320 = memref.load %arg1[%c75] : memref<208xf32, #tpu.memory_space<smem>>
    %321 = vector.broadcast %320 : f32 to vector<1x128xf32>
    %322 = arith.mulf %321, %124 : vector<1x128xf32>
    %323 = arith.addf %319, %322 : vector<1x128xf32>
    %c76 = arith.constant 76 : index
    %324 = memref.load %arg1[%c76] : memref<208xf32, #tpu.memory_space<smem>>
    %325 = vector.broadcast %324 : f32 to vector<1x128xf32>
    %326 = arith.mulf %325, %152 : vector<1x128xf32>
    %327 = arith.addf %323, %326 : vector<1x128xf32>
    %c77 = arith.constant 77 : index
    %328 = memref.load %arg1[%c77] : memref<208xf32, #tpu.memory_space<smem>>
    %329 = vector.broadcast %328 : f32 to vector<1x128xf32>
    %330 = arith.mulf %329, %180 : vector<1x128xf32>
    %331 = arith.addf %327, %330 : vector<1x128xf32>
    %c78 = arith.constant 78 : index
    %332 = memref.load %arg1[%c78] : memref<208xf32, #tpu.memory_space<smem>>
    %333 = vector.broadcast %332 : f32 to vector<1x128xf32>
    %334 = arith.mulf %333, %208 : vector<1x128xf32>
    %335 = arith.addf %331, %334 : vector<1x128xf32>
    %c79 = arith.constant 79 : index
    %336 = memref.load %arg1[%c79] : memref<208xf32, #tpu.memory_space<smem>>
    %337 = vector.broadcast %336 : f32 to vector<1x128xf32>
    %338 = arith.mulf %337, %236 : vector<1x128xf32>
    %339 = arith.addf %335, %338 : vector<1x128xf32>
    %c90 = arith.constant 90 : index
    %340 = memref.load %arg1[%c90] : memref<208xf32, #tpu.memory_space<smem>>
    %341 = vector.broadcast %340 : f32 to vector<1x128xf32>
    %342 = arith.addf %339, %341 : vector<1x128xf32>
    %cst_12 = arith.constant 0.000000e+00 : f32
    %343 = vector.broadcast %cst_12 : f32 to vector<1x128xf32>
    %344 = arith.maximumf %342, %343 : vector<1x128xf32>
    %c80 = arith.constant 80 : index
    %345 = memref.load %arg1[%c80] : memref<208xf32, #tpu.memory_space<smem>>
    %346 = vector.broadcast %345 : f32 to vector<1x128xf32>
    %347 = arith.mulf %346, %40 : vector<1x128xf32>
    %c81 = arith.constant 81 : index
    %348 = memref.load %arg1[%c81] : memref<208xf32, #tpu.memory_space<smem>>
    %349 = vector.broadcast %348 : f32 to vector<1x128xf32>
    %350 = arith.mulf %349, %68 : vector<1x128xf32>
    %351 = arith.addf %347, %350 : vector<1x128xf32>
    %c82 = arith.constant 82 : index
    %352 = memref.load %arg1[%c82] : memref<208xf32, #tpu.memory_space<smem>>
    %353 = vector.broadcast %352 : f32 to vector<1x128xf32>
    %354 = arith.mulf %353, %96 : vector<1x128xf32>
    %355 = arith.addf %351, %354 : vector<1x128xf32>
    %c83 = arith.constant 83 : index
    %356 = memref.load %arg1[%c83] : memref<208xf32, #tpu.memory_space<smem>>
    %357 = vector.broadcast %356 : f32 to vector<1x128xf32>
    %358 = arith.mulf %357, %124 : vector<1x128xf32>
    %359 = arith.addf %355, %358 : vector<1x128xf32>
    %c84 = arith.constant 84 : index
    %360 = memref.load %arg1[%c84] : memref<208xf32, #tpu.memory_space<smem>>
    %361 = vector.broadcast %360 : f32 to vector<1x128xf32>
    %362 = arith.mulf %361, %152 : vector<1x128xf32>
    %363 = arith.addf %359, %362 : vector<1x128xf32>
    %c85 = arith.constant 85 : index
    %364 = memref.load %arg1[%c85] : memref<208xf32, #tpu.memory_space<smem>>
    %365 = vector.broadcast %364 : f32 to vector<1x128xf32>
    %366 = arith.mulf %365, %180 : vector<1x128xf32>
    %367 = arith.addf %363, %366 : vector<1x128xf32>
    %c86 = arith.constant 86 : index
    %368 = memref.load %arg1[%c86] : memref<208xf32, #tpu.memory_space<smem>>
    %369 = vector.broadcast %368 : f32 to vector<1x128xf32>
    %370 = arith.mulf %369, %208 : vector<1x128xf32>
    %371 = arith.addf %367, %370 : vector<1x128xf32>
    %c87 = arith.constant 87 : index
    %372 = memref.load %arg1[%c87] : memref<208xf32, #tpu.memory_space<smem>>
    %373 = vector.broadcast %372 : f32 to vector<1x128xf32>
    %374 = arith.mulf %373, %236 : vector<1x128xf32>
    %375 = arith.addf %371, %374 : vector<1x128xf32>
    %c91 = arith.constant 91 : index
    %376 = memref.load %arg1[%c91] : memref<208xf32, #tpu.memory_space<smem>>
    %377 = vector.broadcast %376 : f32 to vector<1x128xf32>
    %378 = arith.addf %375, %377 : vector<1x128xf32>
    %cst_13 = arith.constant 0.000000e+00 : f32
    %379 = vector.broadcast %cst_13 : f32 to vector<1x128xf32>
    %380 = arith.maximumf %378, %379 : vector<1x128xf32>
    %c92 = arith.constant 92 : index
    %381 = memref.load %arg1[%c92] : memref<208xf32, #tpu.memory_space<smem>>
    %382 = vector.broadcast %381 : f32 to vector<1x128xf32>
    %383 = arith.mulf %382, %272 : vector<1x128xf32>
    %c93 = arith.constant 93 : index
    %384 = memref.load %arg1[%c93] : memref<208xf32, #tpu.memory_space<smem>>
    %385 = vector.broadcast %384 : f32 to vector<1x128xf32>
    %386 = arith.mulf %385, %308 : vector<1x128xf32>
    %387 = arith.addf %383, %386 : vector<1x128xf32>
    %c94 = arith.constant 94 : index
    %388 = memref.load %arg1[%c94] : memref<208xf32, #tpu.memory_space<smem>>
    %389 = vector.broadcast %388 : f32 to vector<1x128xf32>
    %390 = arith.mulf %389, %344 : vector<1x128xf32>
    %391 = arith.addf %387, %390 : vector<1x128xf32>
    %c95 = arith.constant 95 : index
    %392 = memref.load %arg1[%c95] : memref<208xf32, #tpu.memory_space<smem>>
    %393 = vector.broadcast %392 : f32 to vector<1x128xf32>
    %394 = arith.mulf %393, %380 : vector<1x128xf32>
    %395 = arith.addf %391, %394 : vector<1x128xf32>
    %c100 = arith.constant 100 : index
    %396 = memref.load %arg1[%c100] : memref<208xf32, #tpu.memory_space<smem>>
    %397 = vector.broadcast %396 : f32 to vector<1x128xf32>
    %398 = arith.addf %395, %397 : vector<1x128xf32>
    %cst_14 = arith.constant 0.000000e+00 : f32
    %399 = vector.broadcast %cst_14 : f32 to vector<1x128xf32>
    %400 = arith.maximumf %398, %399 : vector<1x128xf32>
    %c96 = arith.constant 96 : index
    %401 = memref.load %arg1[%c96] : memref<208xf32, #tpu.memory_space<smem>>
    %402 = vector.broadcast %401 : f32 to vector<1x128xf32>
    %403 = arith.mulf %402, %272 : vector<1x128xf32>
    %c97 = arith.constant 97 : index
    %404 = memref.load %arg1[%c97] : memref<208xf32, #tpu.memory_space<smem>>
    %405 = vector.broadcast %404 : f32 to vector<1x128xf32>
    %406 = arith.mulf %405, %308 : vector<1x128xf32>
    %407 = arith.addf %403, %406 : vector<1x128xf32>
    %c98 = arith.constant 98 : index
    %408 = memref.load %arg1[%c98] : memref<208xf32, #tpu.memory_space<smem>>
    %409 = vector.broadcast %408 : f32 to vector<1x128xf32>
    %410 = arith.mulf %409, %344 : vector<1x128xf32>
    %411 = arith.addf %407, %410 : vector<1x128xf32>
    %c99 = arith.constant 99 : index
    %412 = memref.load %arg1[%c99] : memref<208xf32, #tpu.memory_space<smem>>
    %413 = vector.broadcast %412 : f32 to vector<1x128xf32>
    %414 = arith.mulf %413, %380 : vector<1x128xf32>
    %415 = arith.addf %411, %414 : vector<1x128xf32>
    %c101 = arith.constant 101 : index
    %416 = memref.load %arg1[%c101] : memref<208xf32, #tpu.memory_space<smem>>
    %417 = vector.broadcast %416 : f32 to vector<1x128xf32>
    %418 = arith.addf %415, %417 : vector<1x128xf32>
    %cst_15 = arith.constant 0.000000e+00 : f32
    %419 = vector.broadcast %cst_15 : f32 to vector<1x128xf32>
    %420 = arith.maximumf %418, %419 : vector<1x128xf32>
    %c102 = arith.constant 102 : index
    %421 = memref.load %arg1[%c102] : memref<208xf32, #tpu.memory_space<smem>>
    %422 = vector.broadcast %421 : f32 to vector<1x128xf32>
    %423 = arith.mulf %422, %400 : vector<1x128xf32>
    %c103 = arith.constant 103 : index
    %424 = memref.load %arg1[%c103] : memref<208xf32, #tpu.memory_space<smem>>
    %425 = vector.broadcast %424 : f32 to vector<1x128xf32>
    %426 = arith.mulf %425, %420 : vector<1x128xf32>
    %427 = arith.addf %423, %426 : vector<1x128xf32>
    %c110 = arith.constant 110 : index
    %428 = memref.load %arg1[%c110] : memref<208xf32, #tpu.memory_space<smem>>
    %429 = vector.broadcast %428 : f32 to vector<1x128xf32>
    %430 = arith.addf %427, %429 : vector<1x128xf32>
    %cst_16 = arith.constant 0.000000e+00 : f32
    %431 = vector.broadcast %cst_16 : f32 to vector<1x128xf32>
    %432 = arith.maximumf %430, %431 : vector<1x128xf32>
    %c104 = arith.constant 104 : index
    %433 = memref.load %arg1[%c104] : memref<208xf32, #tpu.memory_space<smem>>
    %434 = vector.broadcast %433 : f32 to vector<1x128xf32>
    %435 = arith.mulf %434, %400 : vector<1x128xf32>
    %c105 = arith.constant 105 : index
    %436 = memref.load %arg1[%c105] : memref<208xf32, #tpu.memory_space<smem>>
    %437 = vector.broadcast %436 : f32 to vector<1x128xf32>
    %438 = arith.mulf %437, %420 : vector<1x128xf32>
    %439 = arith.addf %435, %438 : vector<1x128xf32>
    %c111 = arith.constant 111 : index
    %440 = memref.load %arg1[%c111] : memref<208xf32, #tpu.memory_space<smem>>
    %441 = vector.broadcast %440 : f32 to vector<1x128xf32>
    %442 = arith.addf %439, %441 : vector<1x128xf32>
    %cst_17 = arith.constant 0.000000e+00 : f32
    %443 = vector.broadcast %cst_17 : f32 to vector<1x128xf32>
    %444 = arith.maximumf %442, %443 : vector<1x128xf32>
    %c106 = arith.constant 106 : index
    %445 = memref.load %arg1[%c106] : memref<208xf32, #tpu.memory_space<smem>>
    %446 = vector.broadcast %445 : f32 to vector<1x128xf32>
    %447 = arith.mulf %446, %400 : vector<1x128xf32>
    %c107 = arith.constant 107 : index
    %448 = memref.load %arg1[%c107] : memref<208xf32, #tpu.memory_space<smem>>
    %449 = vector.broadcast %448 : f32 to vector<1x128xf32>
    %450 = arith.mulf %449, %420 : vector<1x128xf32>
    %451 = arith.addf %447, %450 : vector<1x128xf32>
    %c112 = arith.constant 112 : index
    %452 = memref.load %arg1[%c112] : memref<208xf32, #tpu.memory_space<smem>>
    %453 = vector.broadcast %452 : f32 to vector<1x128xf32>
    %454 = arith.addf %451, %453 : vector<1x128xf32>
    %cst_18 = arith.constant 0.000000e+00 : f32
    %455 = vector.broadcast %cst_18 : f32 to vector<1x128xf32>
    %456 = arith.maximumf %454, %455 : vector<1x128xf32>
    %c108 = arith.constant 108 : index
    %457 = memref.load %arg1[%c108] : memref<208xf32, #tpu.memory_space<smem>>
    %458 = vector.broadcast %457 : f32 to vector<1x128xf32>
    %459 = arith.mulf %458, %400 : vector<1x128xf32>
    %c109 = arith.constant 109 : index
    %460 = memref.load %arg1[%c109] : memref<208xf32, #tpu.memory_space<smem>>
    %461 = vector.broadcast %460 : f32 to vector<1x128xf32>
    %462 = arith.mulf %461, %420 : vector<1x128xf32>
    %463 = arith.addf %459, %462 : vector<1x128xf32>
    %c113 = arith.constant 113 : index
    %464 = memref.load %arg1[%c113] : memref<208xf32, #tpu.memory_space<smem>>
    %465 = vector.broadcast %464 : f32 to vector<1x128xf32>
    %466 = arith.addf %463, %465 : vector<1x128xf32>
    %cst_19 = arith.constant 0.000000e+00 : f32
    %467 = vector.broadcast %cst_19 : f32 to vector<1x128xf32>
    %468 = arith.maximumf %466, %467 : vector<1x128xf32>
    %c114 = arith.constant 114 : index
    %469 = memref.load %arg1[%c114] : memref<208xf32, #tpu.memory_space<smem>>
    %470 = vector.broadcast %469 : f32 to vector<1x128xf32>
    %471 = arith.mulf %470, %432 : vector<1x128xf32>
    %c115 = arith.constant 115 : index
    %472 = memref.load %arg1[%c115] : memref<208xf32, #tpu.memory_space<smem>>
    %473 = vector.broadcast %472 : f32 to vector<1x128xf32>
    %474 = arith.mulf %473, %444 : vector<1x128xf32>
    %475 = arith.addf %471, %474 : vector<1x128xf32>
    %c116 = arith.constant 116 : index
    %476 = memref.load %arg1[%c116] : memref<208xf32, #tpu.memory_space<smem>>
    %477 = vector.broadcast %476 : f32 to vector<1x128xf32>
    %478 = arith.mulf %477, %456 : vector<1x128xf32>
    %479 = arith.addf %475, %478 : vector<1x128xf32>
    %c117 = arith.constant 117 : index
    %480 = memref.load %arg1[%c117] : memref<208xf32, #tpu.memory_space<smem>>
    %481 = vector.broadcast %480 : f32 to vector<1x128xf32>
    %482 = arith.mulf %481, %468 : vector<1x128xf32>
    %483 = arith.addf %479, %482 : vector<1x128xf32>
    %c146 = arith.constant 146 : index
    %484 = memref.load %arg1[%c146] : memref<208xf32, #tpu.memory_space<smem>>
    %485 = vector.broadcast %484 : f32 to vector<1x128xf32>
    %486 = arith.addf %483, %485 : vector<1x128xf32>
    %cst_20 = arith.constant 0.000000e+00 : f32
    %487 = vector.broadcast %cst_20 : f32 to vector<1x128xf32>
    %488 = arith.maximumf %486, %487 : vector<1x128xf32>
    %c118 = arith.constant 118 : index
    %489 = memref.load %arg1[%c118] : memref<208xf32, #tpu.memory_space<smem>>
    %490 = vector.broadcast %489 : f32 to vector<1x128xf32>
    %491 = arith.mulf %490, %432 : vector<1x128xf32>
    %c119 = arith.constant 119 : index
    %492 = memref.load %arg1[%c119] : memref<208xf32, #tpu.memory_space<smem>>
    %493 = vector.broadcast %492 : f32 to vector<1x128xf32>
    %494 = arith.mulf %493, %444 : vector<1x128xf32>
    %495 = arith.addf %491, %494 : vector<1x128xf32>
    %c120 = arith.constant 120 : index
    %496 = memref.load %arg1[%c120] : memref<208xf32, #tpu.memory_space<smem>>
    %497 = vector.broadcast %496 : f32 to vector<1x128xf32>
    %498 = arith.mulf %497, %456 : vector<1x128xf32>
    %499 = arith.addf %495, %498 : vector<1x128xf32>
    %c121 = arith.constant 121 : index
    %500 = memref.load %arg1[%c121] : memref<208xf32, #tpu.memory_space<smem>>
    %501 = vector.broadcast %500 : f32 to vector<1x128xf32>
    %502 = arith.mulf %501, %468 : vector<1x128xf32>
    %503 = arith.addf %499, %502 : vector<1x128xf32>
    %c147 = arith.constant 147 : index
    %504 = memref.load %arg1[%c147] : memref<208xf32, #tpu.memory_space<smem>>
    %505 = vector.broadcast %504 : f32 to vector<1x128xf32>
    %506 = arith.addf %503, %505 : vector<1x128xf32>
    %cst_21 = arith.constant 0.000000e+00 : f32
    %507 = vector.broadcast %cst_21 : f32 to vector<1x128xf32>
    %508 = arith.maximumf %506, %507 : vector<1x128xf32>
    %c122 = arith.constant 122 : index
    %509 = memref.load %arg1[%c122] : memref<208xf32, #tpu.memory_space<smem>>
    %510 = vector.broadcast %509 : f32 to vector<1x128xf32>
    %511 = arith.mulf %510, %432 : vector<1x128xf32>
    %c123 = arith.constant 123 : index
    %512 = memref.load %arg1[%c123] : memref<208xf32, #tpu.memory_space<smem>>
    %513 = vector.broadcast %512 : f32 to vector<1x128xf32>
    %514 = arith.mulf %513, %444 : vector<1x128xf32>
    %515 = arith.addf %511, %514 : vector<1x128xf32>
    %c124 = arith.constant 124 : index
    %516 = memref.load %arg1[%c124] : memref<208xf32, #tpu.memory_space<smem>>
    %517 = vector.broadcast %516 : f32 to vector<1x128xf32>
    %518 = arith.mulf %517, %456 : vector<1x128xf32>
    %519 = arith.addf %515, %518 : vector<1x128xf32>
    %c125 = arith.constant 125 : index
    %520 = memref.load %arg1[%c125] : memref<208xf32, #tpu.memory_space<smem>>
    %521 = vector.broadcast %520 : f32 to vector<1x128xf32>
    %522 = arith.mulf %521, %468 : vector<1x128xf32>
    %523 = arith.addf %519, %522 : vector<1x128xf32>
    %c148 = arith.constant 148 : index
    %524 = memref.load %arg1[%c148] : memref<208xf32, #tpu.memory_space<smem>>
    %525 = vector.broadcast %524 : f32 to vector<1x128xf32>
    %526 = arith.addf %523, %525 : vector<1x128xf32>
    %cst_22 = arith.constant 0.000000e+00 : f32
    %527 = vector.broadcast %cst_22 : f32 to vector<1x128xf32>
    %528 = arith.maximumf %526, %527 : vector<1x128xf32>
    %c126 = arith.constant 126 : index
    %529 = memref.load %arg1[%c126] : memref<208xf32, #tpu.memory_space<smem>>
    %530 = vector.broadcast %529 : f32 to vector<1x128xf32>
    %531 = arith.mulf %530, %432 : vector<1x128xf32>
    %c127 = arith.constant 127 : index
    %532 = memref.load %arg1[%c127] : memref<208xf32, #tpu.memory_space<smem>>
    %533 = vector.broadcast %532 : f32 to vector<1x128xf32>
    %534 = arith.mulf %533, %444 : vector<1x128xf32>
    %535 = arith.addf %531, %534 : vector<1x128xf32>
    %c128 = arith.constant 128 : index
    %536 = memref.load %arg1[%c128] : memref<208xf32, #tpu.memory_space<smem>>
    %537 = vector.broadcast %536 : f32 to vector<1x128xf32>
    %538 = arith.mulf %537, %456 : vector<1x128xf32>
    %539 = arith.addf %535, %538 : vector<1x128xf32>
    %c129 = arith.constant 129 : index
    %540 = memref.load %arg1[%c129] : memref<208xf32, #tpu.memory_space<smem>>
    %541 = vector.broadcast %540 : f32 to vector<1x128xf32>
    %542 = arith.mulf %541, %468 : vector<1x128xf32>
    %543 = arith.addf %539, %542 : vector<1x128xf32>
    %c149 = arith.constant 149 : index
    %544 = memref.load %arg1[%c149] : memref<208xf32, #tpu.memory_space<smem>>
    %545 = vector.broadcast %544 : f32 to vector<1x128xf32>
    %546 = arith.addf %543, %545 : vector<1x128xf32>
    %cst_23 = arith.constant 0.000000e+00 : f32
    %547 = vector.broadcast %cst_23 : f32 to vector<1x128xf32>
    %548 = arith.maximumf %546, %547 : vector<1x128xf32>
    %c130 = arith.constant 130 : index
    %549 = memref.load %arg1[%c130] : memref<208xf32, #tpu.memory_space<smem>>
    %550 = vector.broadcast %549 : f32 to vector<1x128xf32>
    %551 = arith.mulf %550, %432 : vector<1x128xf32>
    %c131 = arith.constant 131 : index
    %552 = memref.load %arg1[%c131] : memref<208xf32, #tpu.memory_space<smem>>
    %553 = vector.broadcast %552 : f32 to vector<1x128xf32>
    %554 = arith.mulf %553, %444 : vector<1x128xf32>
    %555 = arith.addf %551, %554 : vector<1x128xf32>
    %c132 = arith.constant 132 : index
    %556 = memref.load %arg1[%c132] : memref<208xf32, #tpu.memory_space<smem>>
    %557 = vector.broadcast %556 : f32 to vector<1x128xf32>
    %558 = arith.mulf %557, %456 : vector<1x128xf32>
    %559 = arith.addf %555, %558 : vector<1x128xf32>
    %c133 = arith.constant 133 : index
    %560 = memref.load %arg1[%c133] : memref<208xf32, #tpu.memory_space<smem>>
    %561 = vector.broadcast %560 : f32 to vector<1x128xf32>
    %562 = arith.mulf %561, %468 : vector<1x128xf32>
    %563 = arith.addf %559, %562 : vector<1x128xf32>
    %c150 = arith.constant 150 : index
    %564 = memref.load %arg1[%c150] : memref<208xf32, #tpu.memory_space<smem>>
    %565 = vector.broadcast %564 : f32 to vector<1x128xf32>
    %566 = arith.addf %563, %565 : vector<1x128xf32>
    %cst_24 = arith.constant 0.000000e+00 : f32
    %567 = vector.broadcast %cst_24 : f32 to vector<1x128xf32>
    %568 = arith.maximumf %566, %567 : vector<1x128xf32>
    %c134 = arith.constant 134 : index
    %569 = memref.load %arg1[%c134] : memref<208xf32, #tpu.memory_space<smem>>
    %570 = vector.broadcast %569 : f32 to vector<1x128xf32>
    %571 = arith.mulf %570, %432 : vector<1x128xf32>
    %c135 = arith.constant 135 : index
    %572 = memref.load %arg1[%c135] : memref<208xf32, #tpu.memory_space<smem>>
    %573 = vector.broadcast %572 : f32 to vector<1x128xf32>
    %574 = arith.mulf %573, %444 : vector<1x128xf32>
    %575 = arith.addf %571, %574 : vector<1x128xf32>
    %c136 = arith.constant 136 : index
    %576 = memref.load %arg1[%c136] : memref<208xf32, #tpu.memory_space<smem>>
    %577 = vector.broadcast %576 : f32 to vector<1x128xf32>
    %578 = arith.mulf %577, %456 : vector<1x128xf32>
    %579 = arith.addf %575, %578 : vector<1x128xf32>
    %c137 = arith.constant 137 : index
    %580 = memref.load %arg1[%c137] : memref<208xf32, #tpu.memory_space<smem>>
    %581 = vector.broadcast %580 : f32 to vector<1x128xf32>
    %582 = arith.mulf %581, %468 : vector<1x128xf32>
    %583 = arith.addf %579, %582 : vector<1x128xf32>
    %c151 = arith.constant 151 : index
    %584 = memref.load %arg1[%c151] : memref<208xf32, #tpu.memory_space<smem>>
    %585 = vector.broadcast %584 : f32 to vector<1x128xf32>
    %586 = arith.addf %583, %585 : vector<1x128xf32>
    %cst_25 = arith.constant 0.000000e+00 : f32
    %587 = vector.broadcast %cst_25 : f32 to vector<1x128xf32>
    %588 = arith.maximumf %586, %587 : vector<1x128xf32>
    %c138 = arith.constant 138 : index
    %589 = memref.load %arg1[%c138] : memref<208xf32, #tpu.memory_space<smem>>
    %590 = vector.broadcast %589 : f32 to vector<1x128xf32>
    %591 = arith.mulf %590, %432 : vector<1x128xf32>
    %c139 = arith.constant 139 : index
    %592 = memref.load %arg1[%c139] : memref<208xf32, #tpu.memory_space<smem>>
    %593 = vector.broadcast %592 : f32 to vector<1x128xf32>
    %594 = arith.mulf %593, %444 : vector<1x128xf32>
    %595 = arith.addf %591, %594 : vector<1x128xf32>
    %c140 = arith.constant 140 : index
    %596 = memref.load %arg1[%c140] : memref<208xf32, #tpu.memory_space<smem>>
    %597 = vector.broadcast %596 : f32 to vector<1x128xf32>
    %598 = arith.mulf %597, %456 : vector<1x128xf32>
    %599 = arith.addf %595, %598 : vector<1x128xf32>
    %c141 = arith.constant 141 : index
    %600 = memref.load %arg1[%c141] : memref<208xf32, #tpu.memory_space<smem>>
    %601 = vector.broadcast %600 : f32 to vector<1x128xf32>
    %602 = arith.mulf %601, %468 : vector<1x128xf32>
    %603 = arith.addf %599, %602 : vector<1x128xf32>
    %c152 = arith.constant 152 : index
    %604 = memref.load %arg1[%c152] : memref<208xf32, #tpu.memory_space<smem>>
    %605 = vector.broadcast %604 : f32 to vector<1x128xf32>
    %606 = arith.addf %603, %605 : vector<1x128xf32>
    %cst_26 = arith.constant 0.000000e+00 : f32
    %607 = vector.broadcast %cst_26 : f32 to vector<1x128xf32>
    %608 = arith.maximumf %606, %607 : vector<1x128xf32>
    %c142 = arith.constant 142 : index
    %609 = memref.load %arg1[%c142] : memref<208xf32, #tpu.memory_space<smem>>
    %610 = vector.broadcast %609 : f32 to vector<1x128xf32>
    %611 = arith.mulf %610, %432 : vector<1x128xf32>
    %c143 = arith.constant 143 : index
    %612 = memref.load %arg1[%c143] : memref<208xf32, #tpu.memory_space<smem>>
    %613 = vector.broadcast %612 : f32 to vector<1x128xf32>
    %614 = arith.mulf %613, %444 : vector<1x128xf32>
    %615 = arith.addf %611, %614 : vector<1x128xf32>
    %c144 = arith.constant 144 : index
    %616 = memref.load %arg1[%c144] : memref<208xf32, #tpu.memory_space<smem>>
    %617 = vector.broadcast %616 : f32 to vector<1x128xf32>
    %618 = arith.mulf %617, %456 : vector<1x128xf32>
    %619 = arith.addf %615, %618 : vector<1x128xf32>
    %c145 = arith.constant 145 : index
    %620 = memref.load %arg1[%c145] : memref<208xf32, #tpu.memory_space<smem>>
    %621 = vector.broadcast %620 : f32 to vector<1x128xf32>
    %622 = arith.mulf %621, %468 : vector<1x128xf32>
    %623 = arith.addf %619, %622 : vector<1x128xf32>
    %c153 = arith.constant 153 : index
    %624 = memref.load %arg1[%c153] : memref<208xf32, #tpu.memory_space<smem>>
    %625 = vector.broadcast %624 : f32 to vector<1x128xf32>
    %626 = arith.addf %623, %625 : vector<1x128xf32>
    %cst_27 = arith.constant 0.000000e+00 : f32
    %627 = vector.broadcast %cst_27 : f32 to vector<1x128xf32>
    %628 = arith.maximumf %626, %627 : vector<1x128xf32>
    %c154 = arith.constant 154 : index
    %629 = memref.load %arg1[%c154] : memref<208xf32, #tpu.memory_space<smem>>
    %630 = vector.broadcast %629 : f32 to vector<1x128xf32>
    %631 = arith.mulf %630, %488 : vector<1x128xf32>
    %c155 = arith.constant 155 : index
    %632 = memref.load %arg1[%c155] : memref<208xf32, #tpu.memory_space<smem>>
    %633 = vector.broadcast %632 : f32 to vector<1x128xf32>
    %634 = arith.mulf %633, %508 : vector<1x128xf32>
    %635 = arith.addf %631, %634 : vector<1x128xf32>
    %c156 = arith.constant 156 : index
    %636 = memref.load %arg1[%c156] : memref<208xf32, #tpu.memory_space<smem>>
    %637 = vector.broadcast %636 : f32 to vector<1x128xf32>
    %638 = arith.mulf %637, %528 : vector<1x128xf32>
    %639 = arith.addf %635, %638 : vector<1x128xf32>
    %c157 = arith.constant 157 : index
    %640 = memref.load %arg1[%c157] : memref<208xf32, #tpu.memory_space<smem>>
    %641 = vector.broadcast %640 : f32 to vector<1x128xf32>
    %642 = arith.mulf %641, %548 : vector<1x128xf32>
    %643 = arith.addf %639, %642 : vector<1x128xf32>
    %c158 = arith.constant 158 : index
    %644 = memref.load %arg1[%c158] : memref<208xf32, #tpu.memory_space<smem>>
    %645 = vector.broadcast %644 : f32 to vector<1x128xf32>
    %646 = arith.mulf %645, %568 : vector<1x128xf32>
    %647 = arith.addf %643, %646 : vector<1x128xf32>
    %c159 = arith.constant 159 : index
    %648 = memref.load %arg1[%c159] : memref<208xf32, #tpu.memory_space<smem>>
    %649 = vector.broadcast %648 : f32 to vector<1x128xf32>
    %650 = arith.mulf %649, %588 : vector<1x128xf32>
    %651 = arith.addf %647, %650 : vector<1x128xf32>
    %c160 = arith.constant 160 : index
    %652 = memref.load %arg1[%c160] : memref<208xf32, #tpu.memory_space<smem>>
    %653 = vector.broadcast %652 : f32 to vector<1x128xf32>
    %654 = arith.mulf %653, %608 : vector<1x128xf32>
    %655 = arith.addf %651, %654 : vector<1x128xf32>
    %c161 = arith.constant 161 : index
    %656 = memref.load %arg1[%c161] : memref<208xf32, #tpu.memory_space<smem>>
    %657 = vector.broadcast %656 : f32 to vector<1x128xf32>
    %658 = arith.mulf %657, %628 : vector<1x128xf32>
    %659 = arith.addf %655, %658 : vector<1x128xf32>
    %c202 = arith.constant 202 : index
    %660 = memref.load %arg1[%c202] : memref<208xf32, #tpu.memory_space<smem>>
    %661 = vector.broadcast %660 : f32 to vector<1x128xf32>
    %662 = arith.addf %659, %661 : vector<1x128xf32>
    %c0_28 = arith.constant 0 : index
    %c0_29 = arith.constant 0 : index
    %c0_30 = arith.constant 0 : index
    %663 = vector.load %arg3[%c0_28, %c0_29, %c0_30] : memref<6x1x128xf32, #tpu.memory_space<vmem>>, vector<1x1x128xf32>
    %664 = vector.shape_cast %663 : vector<1x1x128xf32> to vector<1x128xf32>
    %665 = vector.shape_cast %662 : vector<1x128xf32> to vector<1x1x128xf32>
    tpu.vector_store %arg3[%c0_28, %c0_29, %c0_30], %665 {strides = array<i32>} : memref<6x1x128xf32, #tpu.memory_space<vmem>>, vector<1x1x128xf32>,
    %c162 = arith.constant 162 : index
    %666 = memref.load %arg1[%c162] : memref<208xf32, #tpu.memory_space<smem>>
    %667 = vector.broadcast %666 : f32 to vector<1x128xf32>
    %668 = arith.mulf %667, %488 : vector<1x128xf32>
    %c163 = arith.constant 163 : index
    %669 = memref.load %arg1[%c163] : memref<208xf32, #tpu.memory_space<smem>>
    %670 = vector.broadcast %669 : f32 to vector<1x128xf32>
    %671 = arith.mulf %670, %508 : vector<1x128xf32>
    %672 = arith.addf %668, %671 : vector<1x128xf32>
    %c164 = arith.constant 164 : index
    %673 = memref.load %arg1[%c164] : memref<208xf32, #tpu.memory_space<smem>>
    %674 = vector.broadcast %673 : f32 to vector<1x128xf32>
    %675 = arith.mulf %674, %528 : vector<1x128xf32>
    %676 = arith.addf %672, %675 : vector<1x128xf32>
    %c165 = arith.constant 165 : index
    %677 = memref.load %arg1[%c165] : memref<208xf32, #tpu.memory_space<smem>>
    %678 = vector.broadcast %677 : f32 to vector<1x128xf32>
    %679 = arith.mulf %678, %548 : vector<1x128xf32>
    %680 = arith.addf %676, %679 : vector<1x128xf32>
    %c166 = arith.constant 166 : index
    %681 = memref.load %arg1[%c166] : memref<208xf32, #tpu.memory_space<smem>>
    %682 = vector.broadcast %681 : f32 to vector<1x128xf32>
    %683 = arith.mulf %682, %568 : vector<1x128xf32>
    %684 = arith.addf %680, %683 : vector<1x128xf32>
    %c167 = arith.constant 167 : index
    %685 = memref.load %arg1[%c167] : memref<208xf32, #tpu.memory_space<smem>>
    %686 = vector.broadcast %685 : f32 to vector<1x128xf32>
    %687 = arith.mulf %686, %588 : vector<1x128xf32>
    %688 = arith.addf %684, %687 : vector<1x128xf32>
    %c168 = arith.constant 168 : index
    %689 = memref.load %arg1[%c168] : memref<208xf32, #tpu.memory_space<smem>>
    %690 = vector.broadcast %689 : f32 to vector<1x128xf32>
    %691 = arith.mulf %690, %608 : vector<1x128xf32>
    %692 = arith.addf %688, %691 : vector<1x128xf32>
    %c169 = arith.constant 169 : index
    %693 = memref.load %arg1[%c169] : memref<208xf32, #tpu.memory_space<smem>>
    %694 = vector.broadcast %693 : f32 to vector<1x128xf32>
    %695 = arith.mulf %694, %628 : vector<1x128xf32>
    %696 = arith.addf %692, %695 : vector<1x128xf32>
    %c203 = arith.constant 203 : index
    %697 = memref.load %arg1[%c203] : memref<208xf32, #tpu.memory_space<smem>>
    %698 = vector.broadcast %697 : f32 to vector<1x128xf32>
    %699 = arith.addf %696, %698 : vector<1x128xf32>
    %c1_31 = arith.constant 1 : index
    %c0_32 = arith.constant 0 : index
    %c0_33 = arith.constant 0 : index
    %700 = vector.load %arg3[%c1_31, %c0_32, %c0_33] : memref<6x1x128xf32, #tpu.memory_space<vmem>>, vector<1x1x128xf32>
    %701 = vector.shape_cast %700 : vector<1x1x128xf32> to vector<1x128xf32>
    %702 = vector.shape_cast %699 : vector<1x128xf32> to vector<1x1x128xf32>
    tpu.vector_store %arg3[%c1_31, %c0_32, %c0_33], %702 {strides = array<i32>} : memref<6x1x128xf32, #tpu.memory_space<vmem>>, vector<1x1x128xf32>,
    %c170 = arith.constant 170 : index
    %703 = memref.load %arg1[%c170] : memref<208xf32, #tpu.memory_space<smem>>
    %704 = vector.broadcast %703 : f32 to vector<1x128xf32>
    %705 = arith.mulf %704, %488 : vector<1x128xf32>
    %c171 = arith.constant 171 : index
    %706 = memref.load %arg1[%c171] : memref<208xf32, #tpu.memory_space<smem>>
    %707 = vector.broadcast %706 : f32 to vector<1x128xf32>
    %708 = arith.mulf %707, %508 : vector<1x128xf32>
    %709 = arith.addf %705, %708 : vector<1x128xf32>
    %c172 = arith.constant 172 : index
    %710 = memref.load %arg1[%c172] : memref<208xf32, #tpu.memory_space<smem>>
    %711 = vector.broadcast %710 : f32 to vector<1x128xf32>
    %712 = arith.mulf %711, %528 : vector<1x128xf32>
    %713 = arith.addf %709, %712 : vector<1x128xf32>
    %c173 = arith.constant 173 : index
    %714 = memref.load %arg1[%c173] : memref<208xf32, #tpu.memory_space<smem>>
    %715 = vector.broadcast %714 : f32 to vector<1x128xf32>
    %716 = arith.mulf %715, %548 : vector<1x128xf32>
    %717 = arith.addf %713, %716 : vector<1x128xf32>
    %c174 = arith.constant 174 : index
    %718 = memref.load %arg1[%c174] : memref<208xf32, #tpu.memory_space<smem>>
    %719 = vector.broadcast %718 : f32 to vector<1x128xf32>
    %720 = arith.mulf %719, %568 : vector<1x128xf32>
    %721 = arith.addf %717, %720 : vector<1x128xf32>
    %c175 = arith.constant 175 : index
    %722 = memref.load %arg1[%c175] : memref<208xf32, #tpu.memory_space<smem>>
    %723 = vector.broadcast %722 : f32 to vector<1x128xf32>
    %724 = arith.mulf %723, %588 : vector<1x128xf32>
    %725 = arith.addf %721, %724 : vector<1x128xf32>
    %c176 = arith.constant 176 : index
    %726 = memref.load %arg1[%c176] : memref<208xf32, #tpu.memory_space<smem>>
    %727 = vector.broadcast %726 : f32 to vector<1x128xf32>
    %728 = arith.mulf %727, %608 : vector<1x128xf32>
    %729 = arith.addf %725, %728 : vector<1x128xf32>
    %c177 = arith.constant 177 : index
    %730 = memref.load %arg1[%c177] : memref<208xf32, #tpu.memory_space<smem>>
    %731 = vector.broadcast %730 : f32 to vector<1x128xf32>
    %732 = arith.mulf %731, %628 : vector<1x128xf32>
    %733 = arith.addf %729, %732 : vector<1x128xf32>
    %c204 = arith.constant 204 : index
    %734 = memref.load %arg1[%c204] : memref<208xf32, #tpu.memory_space<smem>>
    %735 = vector.broadcast %734 : f32 to vector<1x128xf32>
    %736 = arith.addf %733, %735 : vector<1x128xf32>
    %c2_34 = arith.constant 2 : index
    %c0_35 = arith.constant 0 : index
    %c0_36 = arith.constant 0 : index
    %737 = vector.load %arg3[%c2_34, %c0_35, %c0_36] : memref<6x1x128xf32, #tpu.memory_space<vmem>>, vector<1x1x128xf32>
    %738 = vector.shape_cast %737 : vector<1x1x128xf32> to vector<1x128xf32>
    %739 = vector.shape_cast %736 : vector<1x128xf32> to vector<1x1x128xf32>
    tpu.vector_store %arg3[%c2_34, %c0_35, %c0_36], %739 {strides = array<i32>} : memref<6x1x128xf32, #tpu.memory_space<vmem>>, vector<1x1x128xf32>,
    %c178 = arith.constant 178 : index
    %740 = memref.load %arg1[%c178] : memref<208xf32, #tpu.memory_space<smem>>
    %741 = vector.broadcast %740 : f32 to vector<1x128xf32>
    %742 = arith.mulf %741, %488 : vector<1x128xf32>
    %c179 = arith.constant 179 : index
    %743 = memref.load %arg1[%c179] : memref<208xf32, #tpu.memory_space<smem>>
    %744 = vector.broadcast %743 : f32 to vector<1x128xf32>
    %745 = arith.mulf %744, %508 : vector<1x128xf32>
    %746 = arith.addf %742, %745 : vector<1x128xf32>
    %c180 = arith.constant 180 : index
    %747 = memref.load %arg1[%c180] : memref<208xf32, #tpu.memory_space<smem>>
    %748 = vector.broadcast %747 : f32 to vector<1x128xf32>
    %749 = arith.mulf %748, %528 : vector<1x128xf32>
    %750 = arith.addf %746, %749 : vector<1x128xf32>
    %c181 = arith.constant 181 : index
    %751 = memref.load %arg1[%c181] : memref<208xf32, #tpu.memory_space<smem>>
    %752 = vector.broadcast %751 : f32 to vector<1x128xf32>
    %753 = arith.mulf %752, %548 : vector<1x128xf32>
    %754 = arith.addf %750, %753 : vector<1x128xf32>
    %c182 = arith.constant 182 : index
    %755 = memref.load %arg1[%c182] : memref<208xf32, #tpu.memory_space<smem>>
    %756 = vector.broadcast %755 : f32 to vector<1x128xf32>
    %757 = arith.mulf %756, %568 : vector<1x128xf32>
    %758 = arith.addf %754, %757 : vector<1x128xf32>
    %c183 = arith.constant 183 : index
    %759 = memref.load %arg1[%c183] : memref<208xf32, #tpu.memory_space<smem>>
    %760 = vector.broadcast %759 : f32 to vector<1x128xf32>
    %761 = arith.mulf %760, %588 : vector<1x128xf32>
    %762 = arith.addf %758, %761 : vector<1x128xf32>
    %c184 = arith.constant 184 : index
    %763 = memref.load %arg1[%c184] : memref<208xf32, #tpu.memory_space<smem>>
    %764 = vector.broadcast %763 : f32 to vector<1x128xf32>
    %765 = arith.mulf %764, %608 : vector<1x128xf32>
    %766 = arith.addf %762, %765 : vector<1x128xf32>
    %c185 = arith.constant 185 : index
    %767 = memref.load %arg1[%c185] : memref<208xf32, #tpu.memory_space<smem>>
    %768 = vector.broadcast %767 : f32 to vector<1x128xf32>
    %769 = arith.mulf %768, %628 : vector<1x128xf32>
    %770 = arith.addf %766, %769 : vector<1x128xf32>
    %c205 = arith.constant 205 : index
    %771 = memref.load %arg1[%c205] : memref<208xf32, #tpu.memory_space<smem>>
    %772 = vector.broadcast %771 : f32 to vector<1x128xf32>
    %773 = arith.addf %770, %772 : vector<1x128xf32>
    %c3_37 = arith.constant 3 : index
    %c0_38 = arith.constant 0 : index
    %c0_39 = arith.constant 0 : index
    %774 = vector.load %arg3[%c3_37, %c0_38, %c0_39] : memref<6x1x128xf32, #tpu.memory_space<vmem>>, vector<1x1x128xf32>
    %775 = vector.shape_cast %774 : vector<1x1x128xf32> to vector<1x128xf32>
    %776 = vector.shape_cast %773 : vector<1x128xf32> to vector<1x1x128xf32>
    tpu.vector_store %arg3[%c3_37, %c0_38, %c0_39], %776 {strides = array<i32>} : memref<6x1x128xf32, #tpu.memory_space<vmem>>, vector<1x1x128xf32>,
    %c186 = arith.constant 186 : index
    %777 = memref.load %arg1[%c186] : memref<208xf32, #tpu.memory_space<smem>>
    %778 = vector.broadcast %777 : f32 to vector<1x128xf32>
    %779 = arith.mulf %778, %488 : vector<1x128xf32>
    %c187 = arith.constant 187 : index
    %780 = memref.load %arg1[%c187] : memref<208xf32, #tpu.memory_space<smem>>
    %781 = vector.broadcast %780 : f32 to vector<1x128xf32>
    %782 = arith.mulf %781, %508 : vector<1x128xf32>
    %783 = arith.addf %779, %782 : vector<1x128xf32>
    %c188 = arith.constant 188 : index
    %784 = memref.load %arg1[%c188] : memref<208xf32, #tpu.memory_space<smem>>
    %785 = vector.broadcast %784 : f32 to vector<1x128xf32>
    %786 = arith.mulf %785, %528 : vector<1x128xf32>
    %787 = arith.addf %783, %786 : vector<1x128xf32>
    %c189 = arith.constant 189 : index
    %788 = memref.load %arg1[%c189] : memref<208xf32, #tpu.memory_space<smem>>
    %789 = vector.broadcast %788 : f32 to vector<1x128xf32>
    %790 = arith.mulf %789, %548 : vector<1x128xf32>
    %791 = arith.addf %787, %790 : vector<1x128xf32>
    %c190 = arith.constant 190 : index
    %792 = memref.load %arg1[%c190] : memref<208xf32, #tpu.memory_space<smem>>
    %793 = vector.broadcast %792 : f32 to vector<1x128xf32>
    %794 = arith.mulf %793, %568 : vector<1x128xf32>
    %795 = arith.addf %791, %794 : vector<1x128xf32>
    %c191 = arith.constant 191 : index
    %796 = memref.load %arg1[%c191] : memref<208xf32, #tpu.memory_space<smem>>
    %797 = vector.broadcast %796 : f32 to vector<1x128xf32>
    %798 = arith.mulf %797, %588 : vector<1x128xf32>
    %799 = arith.addf %795, %798 : vector<1x128xf32>
    %c192 = arith.constant 192 : index
    %800 = memref.load %arg1[%c192] : memref<208xf32, #tpu.memory_space<smem>>
    %801 = vector.broadcast %800 : f32 to vector<1x128xf32>
    %802 = arith.mulf %801, %608 : vector<1x128xf32>
    %803 = arith.addf %799, %802 : vector<1x128xf32>
    %c193 = arith.constant 193 : index
    %804 = memref.load %arg1[%c193] : memref<208xf32, #tpu.memory_space<smem>>
    %805 = vector.broadcast %804 : f32 to vector<1x128xf32>
    %806 = arith.mulf %805, %628 : vector<1x128xf32>
    %807 = arith.addf %803, %806 : vector<1x128xf32>
    %c206 = arith.constant 206 : index
    %808 = memref.load %arg1[%c206] : memref<208xf32, #tpu.memory_space<smem>>
    %809 = vector.broadcast %808 : f32 to vector<1x128xf32>
    %810 = arith.addf %807, %809 : vector<1x128xf32>
    %c4_40 = arith.constant 4 : index
    %c0_41 = arith.constant 0 : index
    %c0_42 = arith.constant 0 : index
    %811 = vector.load %arg3[%c4_40, %c0_41, %c0_42] : memref<6x1x128xf32, #tpu.memory_space<vmem>>, vector<1x1x128xf32>
    %812 = vector.shape_cast %811 : vector<1x1x128xf32> to vector<1x128xf32>
    %813 = vector.shape_cast %810 : vector<1x128xf32> to vector<1x1x128xf32>
    tpu.vector_store %arg3[%c4_40, %c0_41, %c0_42], %813 {strides = array<i32>} : memref<6x1x128xf32, #tpu.memory_space<vmem>>, vector<1x1x128xf32>,
    %c194 = arith.constant 194 : index
    %814 = memref.load %arg1[%c194] : memref<208xf32, #tpu.memory_space<smem>>
    %815 = vector.broadcast %814 : f32 to vector<1x128xf32>
    %816 = arith.mulf %815, %488 : vector<1x128xf32>
    %c195 = arith.constant 195 : index
    %817 = memref.load %arg1[%c195] : memref<208xf32, #tpu.memory_space<smem>>
    %818 = vector.broadcast %817 : f32 to vector<1x128xf32>
    %819 = arith.mulf %818, %508 : vector<1x128xf32>
    %820 = arith.addf %816, %819 : vector<1x128xf32>
    %c196 = arith.constant 196 : index
    %821 = memref.load %arg1[%c196] : memref<208xf32, #tpu.memory_space<smem>>
    %822 = vector.broadcast %821 : f32 to vector<1x128xf32>
    %823 = arith.mulf %822, %528 : vector<1x128xf32>
    %824 = arith.addf %820, %823 : vector<1x128xf32>
    %c197 = arith.constant 197 : index
    %825 = memref.load %arg1[%c197] : memref<208xf32, #tpu.memory_space<smem>>
    %826 = vector.broadcast %825 : f32 to vector<1x128xf32>
    %827 = arith.mulf %826, %548 : vector<1x128xf32>
    %828 = arith.addf %824, %827 : vector<1x128xf32>
    %c198 = arith.constant 198 : index
    %829 = memref.load %arg1[%c198] : memref<208xf32, #tpu.memory_space<smem>>
    %830 = vector.broadcast %829 : f32 to vector<1x128xf32>
    %831 = arith.mulf %830, %568 : vector<1x128xf32>
    %832 = arith.addf %828, %831 : vector<1x128xf32>
    %c199 = arith.constant 199 : index
    %833 = memref.load %arg1[%c199] : memref<208xf32, #tpu.memory_space<smem>>
    %834 = vector.broadcast %833 : f32 to vector<1x128xf32>
    %835 = arith.mulf %834, %588 : vector<1x128xf32>
    %836 = arith.addf %832, %835 : vector<1x128xf32>
    %c200 = arith.constant 200 : index
    %837 = memref.load %arg1[%c200] : memref<208xf32, #tpu.memory_space<smem>>
    %838 = vector.broadcast %837 : f32 to vector<1x128xf32>
    %839 = arith.mulf %838, %608 : vector<1x128xf32>
    %840 = arith.addf %836, %839 : vector<1x128xf32>
    %c201 = arith.constant 201 : index
    %841 = memref.load %arg1[%c201] : memref<208xf32, #tpu.memory_space<smem>>
    %842 = vector.broadcast %841 : f32 to vector<1x128xf32>
    %843 = arith.mulf %842, %628 : vector<1x128xf32>
    %844 = arith.addf %840, %843 : vector<1x128xf32>
    %c207 = arith.constant 207 : index
    %845 = memref.load %arg1[%c207] : memref<208xf32, #tpu.memory_space<smem>>
    %846 = vector.broadcast %845 : f32 to vector<1x128xf32>
    %847 = arith.addf %844, %846 : vector<1x128xf32>
    %c5_43 = arith.constant 5 : index
    %c0_44 = arith.constant 0 : index
    %c0_45 = arith.constant 0 : index
    %848 = vector.load %arg3[%c5_43, %c0_44, %c0_45] : memref<6x1x128xf32, #tpu.memory_space<vmem>>, vector<1x1x128xf32>
    %849 = vector.shape_cast %848 : vector<1x1x128xf32> to vector<1x128xf32>
    %850 = vector.shape_cast %847 : vector<1x128xf32> to vector<1x1x128xf32>
    tpu.vector_store %arg3[%c5_43, %c0_44, %c0_45], %850 {strides = array<i32>} : memref<6x1x128xf32, #tpu.memory_space<vmem>>, vector<1x1x128xf32>,
    return
  }
  func.func @transform_0(%arg0: i32) -> i32 {
    %c0_i32 = arith.constant 0 : i32
    %c0_i32_0 = arith.constant 0 : i32
    return %c0_i32 : i32
  }
  func.func @transform_1(%arg0: i32) -> (i32, i32, i32) {
    %c0_i32 = arith.constant 0 : i32
    %c0_i32_0 = arith.constant 0 : i32
    %c0_i32_1 = arith.constant 0 : i32
    return %c0_i32, %arg0, %c0_i32_0 : i32, i32, i32
  }
  func.func @transform_2(%arg0: i32) -> (i32, i32, i32) {
    %c0_i32 = arith.constant 0 : i32
    %c0_i32_0 = arith.constant 0 : i32
    %c0_i32_1 = arith.constant 0 : i32
    return %c0_i32, %arg0, %c0_i32_0 : i32, i32, i32
  }
}

</mosaic_0001>

<llo_original>
// kernel: improved_autoencoder.1
$region0: #{improved_autoencoder.1}
  #allocation0 [shape = 'u32[]', space=smem, size = 0x4, offset = 0x4, fixed_abs, tag = 'smem constant byte address 0x4 - core index']
  #allocation1 [shape = 'u32[144,128]{1,0:T(1,128)}', space=vmem, size = 0x12000, scoped, tag = 'internal scratch']
  %s0 = inlined_call_operand.vmem [shape: f32[208], index: 0, kind: input, shape index: {}]
  %s1 = inlined_call_operand.vmem [shape: f32[6,1,128], index: 1, kind: input, shape index: {}]
  %s2 = inlined_call_operand.vmem [shape: f32[6,1,128], index: 2, kind: output, shape index: {}]
  %s3 = sld [smem:[#allocation0]]
  $region22: #{improved_autoencoder.1} parent=0
    _
  %s5 = ssub.s32 1, %s3
  %s6 = scalar_select 0, %s5, %s3
  $region1: #{improved_autoencoder.1} parent=0
    #allocation2 [shape = 'u8[1024]{0}', space=smem, size = 0x400, scoped, tag = 'input window, operand 0, single buffered']
    #allocation3 [shape = 's32[1]{0}', space=sflag, size = 0x4, scoped, tag = 'scoped memory for improved_autoencoder.1']
    %7 = vsyncpa [#allocation3], 0
    // Predicated region
    $region2: #{improved_autoencoder.1} parent=1 // pred_check
      _
    $region3: #{improved_autoencoder.1} parent=1 // pred_check_branch
      %9 = sbr.rel (0) target = $region5
    $region4: #{improved_autoencoder.1} parent=1 // pred_region
      %s11 = ssub.s32 32, 32
      %12 = vsyncadd [#allocation3], %s11
      %s14 = sshll.u32 %s0, 4
      %s15 = int_to_ptr.vmem [resolvable:$true] %s14
      %17 = dma.vmem_to_smem %s15, 32, [#allocation2], [#allocation3]
    $region5: #{improved_autoencoder.1} parent=1 // pred_fallthru
      _
    // Predicated region
    $region6: #{improved_autoencoder.1} parent=1 // pred_check
      _
    $region7: #{improved_autoencoder.1} parent=1 // pred_check_branch
      %19 = sbr.rel (0) target = $region9
    $region8: #{improved_autoencoder.1} parent=1 // pred_region
      _
    $region9: #{improved_autoencoder.1} parent=1 // pred_fallthru
      _
    // Predicated region
    $region10: #{improved_autoencoder.1} parent=1 // pred_check
      _
    $region11: #{improved_autoencoder.1} parent=1 // pred_check_branch
      %21 = sbr.rel (0) target = $region13
    $region12: #{improved_autoencoder.1} parent=1 // pred_region
      %22 = dma.done [#allocation3], 32
    $region13: #{improved_autoencoder.1} parent=1 // pred_fallthru
      _
    %23 = sfence
    %v24 = vld [vmem:[%s1] sm:$0x1]
    %v25 = vld [vmem:[%s1 + $0x1] sm:$0x1]
    %v26 = vld [vmem:[%s1 + $0x2] sm:$0x1]
    %v27 = vld [vmem:[%s1 + $0x3] sm:$0x1]
    %v28 = vld [vmem:[%s1 + $0x4] sm:$0x1]
    %v29 = vld [vmem:[%s1 + $0x5] sm:$0x1]
    %s30 = sld [smem:[#allocation2]]
    %v31 = vstv %s30
    %v32 = vmul.f32 %v31, %v24
    %s33 = sld [smem:[#allocation2 + $0x1]]
    %v34 = vstv %s33
    %v35 = vmul.f32 %v34, %v25
    %v36 = vadd.f32 %v32, %v35
    %s37 = sld [smem:[#allocation2 + $0x2]]
    %v38 = vstv %s37
    %v39 = vmul.f32 %v38, %v26
    %v40 = vadd.f32 %v36, %v39
    %s41 = sld [smem:[#allocation2 + $0x3]]
    %v42 = vstv %s41
    %v43 = vmul.f32 %v42, %v27
    %v44 = vadd.f32 %v40, %v43
    %s45 = sld [smem:[#allocation2 + $0x4]]
    %v46 = vstv %s45
    %v47 = vmul.f32 %v46, %v28
    %v48 = vadd.f32 %v44, %v47
    %s49 = sld [smem:[#allocation2 + $0x5]]
    %v50 = vstv %s49
    %v51 = vmul.f32 %v50, %v29
    %v52 = vadd.f32 %v48, %v51
    %s53 = sld [smem:[#allocation2 + $0x30]]
    %v54 = vstv %s53
    %v55 = vadd.f32 %v52, %v54
    %v56 = vmax.f32 %v55, 0.0
    %s57 = sld [smem:[#allocation2 + $0x6]]
    %v58 = vstv %s57
    %v59 = vmul.f32 %v58, %v24
    %s60 = sld [smem:[#allocation2 + $0x7]]
    %v61 = vstv %s60
    %v62 = vmul.f32 %v61, %v25
    %v63 = vadd.f32 %v59, %v62
    %s64 = sld [smem:[#allocation2 + $0x8]]
    %v65 = vstv %s64
    %v66 = vmul.f32 %v65, %v26
    %v67 = vadd.f32 %v63, %v66
    %s68 = sld [smem:[#allocation2 + $0x9]]
    %v69 = vstv %s68
    %v70 = vmul.f32 %v69, %v27
    %v71 = vadd.f32 %v67, %v70
    %s72 = sld [smem:[#allocation2 + $0xa]]
    %v73 = vstv %s72
    %v74 = vmul.f32 %v73, %v28
    %v75 = vadd.f32 %v71, %v74
    %s76 = sld [smem:[#allocation2 + $0xb]]
    %v77 = vstv %s76
    %v78 = vmul.f32 %v77, %v29
    %v79 = vadd.f32 %v75, %v78
    %s80 = sld [smem:[#allocation2 + $0x31]]
    %v81 = vstv %s80
    %v82 = vadd.f32 %v79, %v81
    %v83 = vmax.f32 %v82, 0.0
    %s84 = sld [smem:[#allocation2 + $0xc]]
    %v85 = vstv %s84
    %v86 = vmul.f32 %v85, %v24
    %s87 = sld [smem:[#allocation2 + $0xd]]
    %v88 = vstv %s87
    %v89 = vmul.f32 %v88, %v25
    %v90 = vadd.f32 %v86, %v89
    %s91 = sld [smem:[#allocation2 + $0xe]]
    %v92 = vstv %s91
    %v93 = vmul.f32 %v92, %v26
    %v94 = vadd.f32 %v90, %v93
    %s95 = sld [smem:[#allocation2 + $0xf]]
    %v96 = vstv %s95
    %v97 = vmul.f32 %v96, %v27
    %v98 = vadd.f32 %v94, %v97
    %s99 = sld [smem:[#allocation2 + $0x10]]
    %v100 = vstv %s99
    %v101 = vmul.f32 %v100, %v28
    %v102 = vadd.f32 %v98, %v101
    %s103 = sld [smem:[#allocation2 + $0x11]]
    %v104 = vstv %s103
    %v105 = vmul.f32 %v104, %v29
    %v106 = vadd.f32 %v102, %v105
    %s107 = sld [smem:[#allocation2 + $0x32]]
    %v108 = vstv %s107
    %v109 = vadd.f32 %v106, %v108
    %v110 = vmax.f32 %v109, 0.0
    %s111 = sld [smem:[#allocation2 + $0x12]]
    %v112 = vstv %s111
    %v113 = vmul.f32 %v112, %v24
    %s114 = sld [smem:[#allocation2 + $0x13]]
    %v115 = vstv %s114
    %v116 = vmul.f32 %v115, %v25
    %v117 = vadd.f32 %v113, %v116
    %s118 = sld [smem:[#allocation2 + $0x14]]
    %v119 = vstv %s118
    %v120 = vmul.f32 %v119, %v26
    %v121 = vadd.f32 %v117, %v120
    %s122 = sld [smem:[#allocation2 + $0x15]]
    %v123 = vstv %s122
    %v124 = vmul.f32 %v123, %v27
    %v125 = vadd.f32 %v121, %v124
    %s126 = sld [smem:[#allocation2 + $0x16]]
    %v127 = vstv %s126
    %v128 = vmul.f32 %v127, %v28
    %v129 = vadd.f32 %v125, %v128
    %s130 = sld [smem:[#allocation2 + $0x17]]
    %v131 = vstv %s130
    %v132 = vmul.f32 %v131, %v29
    %v133 = vadd.f32 %v129, %v132
    %s134 = sld [smem:[#allocation2 + $0x33]]
    %v135 = vstv %s134
    %v136 = vadd.f32 %v133, %v135
    %v137 = vmax.f32 %v136, 0.0
    %s138 = sld [smem:[#allocation2 + $0x18]]
    %v139 = vstv %s138
    %v140 = vmul.f32 %v139, %v24
    %s141 = sld [smem:[#allocation2 + $0x19]]
    %v142 = vstv %s141
    %v143 = vmul.f32 %v142, %v25
    %v144 = vadd.f32 %v140, %v143
    %s145 = sld [smem:[#allocation2 + $0x1a]]
    %v146 = vstv %s145
    %v147 = vmul.f32 %v146, %v26
    %v148 = vadd.f32 %v144, %v147
    %s149 = sld [smem:[#allocation2 + $0x1b]]
    %v150 = vstv %s149
    %v151 = vmul.f32 %v150, %v27
    %v152 = vadd.f32 %v148, %v151
    %s153 = sld [smem:[#allocation2 + $0x1c]]
    %v154 = vstv %s153
    %v155 = vmul.f32 %v154, %v28
    %v156 = vadd.f32 %v152, %v155
    %s157 = sld [smem:[#allocation2 + $0x1d]]
    %v158 = vstv %s157
    %v159 = vmul.f32 %v158, %v29
    %v160 = vadd.f32 %v156, %v159
    %s161 = sld [smem:[#allocation2 + $0x34]]
    %v162 = vstv %s161
    %v163 = vadd.f32 %v160, %v162
    %v164 = vmax.f32 %v163, 0.0
    %s165 = sld [smem:[#allocation2 + $0x1e]]
    %v166 = vstv %s165
    %v167 = vmul.f32 %v166, %v24
    %s168 = sld [smem:[#allocation2 + $0x1f]]
    %v169 = vstv %s168
    %v170 = vmul.f32 %v169, %v25
    %v171 = vadd.f32 %v167, %v170
    %s172 = sld [smem:[#allocation2 + $0x20]]
    %v173 = vstv %s172
    %v174 = vmul.f32 %v173, %v26
    %v175 = vadd.f32 %v171, %v174
    %s176 = sld [smem:[#allocation2 + $0x21]]
    %v177 = vstv %s176
    %v178 = vmul.f32 %v177, %v27
    %v179 = vadd.f32 %v175, %v178
    %s180 = sld [smem:[#allocation2 + $0x22]]
    %v181 = vstv %s180
    %v182 = vmul.f32 %v181, %v28
    %v183 = vadd.f32 %v179, %v182
    %s184 = sld [smem:[#allocation2 + $0x23]]
    %v185 = vstv %s184
    %v186 = vmul.f32 %v185, %v29
    %v187 = vadd.f32 %v183, %v186
    %s188 = sld [smem:[#allocation2 + $0x35]]
    %v189 = vstv %s188
    %v190 = vadd.f32 %v187, %v189
    %v191 = vmax.f32 %v190, 0.0
    %s192 = sld [smem:[#allocation2 + $0x24]]
    %v193 = vstv %s192
    %v194 = vmul.f32 %v193, %v24
    %s195 = sld [smem:[#allocation2 + $0x25]]
    %v196 = vstv %s195
    %v197 = vmul.f32 %v196, %v25
    %v198 = vadd.f32 %v194, %v197
    %s199 = sld [smem:[#allocation2 + $0x26]]
    %v200 = vstv %s199
    %v201 = vmul.f32 %v200, %v26
    %v202 = vadd.f32 %v198, %v201
    %s203 = sld [smem:[#allocation2 + $0x27]]
    %v204 = vstv %s203
    %v205 = vmul.f32 %v204, %v27
    %v206 = vadd.f32 %v202, %v205
    %s207 = sld [smem:[#allocation2 + $0x28]]
    %v208 = vstv %s207
    %v209 = vmul.f32 %v208, %v28
    %v210 = vadd.f32 %v206, %v209
    %s211 = sld [smem:[#allocation2 + $0x29]]
    %v212 = vstv %s211
    %v213 = vmul.f32 %v212, %v29
    %v214 = vadd.f32 %v210, %v213
    %s215 = sld [smem:[#allocation2 + $0x36]]
    %v216 = vstv %s215
    %v217 = vadd.f32 %v214, %v216
    %v218 = vmax.f32 %v217, 0.0
    %s219 = sld [smem:[#allocation2 + $0x2a]]
    %v220 = vstv %s219
    %v221 = vmul.f32 %v220, %v24
    %s222 = sld [smem:[#allocation2 + $0x2b]]
    %v223 = vstv %s222
    %v224 = vmul.f32 %v223, %v25
    %v225 = vadd.f32 %v221, %v224
    %s226 = sld [smem:[#allocation2 + $0x2c]]
    %v227 = vstv %s226
    %v228 = vmul.f32 %v227, %v26
    %v229 = vadd.f32 %v225, %v228
    %s230 = sld [smem:[#allocation2 + $0x2d]]
    %v231 = vstv %s230
    %v232 = vmul.f32 %v231, %v27
    %v233 = vadd.f32 %v229, %v232
    %s234 = sld [smem:[#allocation2 + $0x2e]]
    %v235 = vstv %s234
    %v236 = vmul.f32 %v235, %v28
    %v237 = vadd.f32 %v233, %v236
    %s238 = sld [smem:[#allocation2 + $0x2f]]
    %v239 = vstv %s238
    %v240 = vmul.f32 %v239, %v29
    %v241 = vadd.f32 %v237, %v240
    %s242 = sld [smem:[#allocation2 + $0x37]]
    %v243 = vstv %s242
    %v244 = vadd.f32 %v241, %v243
    %v245 = vmax.f32 %v244, 0.0
    %s246 = sld [smem:[#allocation2 + $0x38]]
    %v247 = vstv %s246
    %v248 = vmul.f32 %v247, %v56
    %s249 = sld [smem:[#allocation2 + $0x39]]
    %v250 = vstv %s249
    %v251 = vmul.f32 %v250, %v83
    %v252 = vadd.f32 %v248, %v251
    %s253 = sld [smem:[#allocation2 + $0x3a]]
    %v254 = vstv %s253
    %v255 = vmul.f32 %v254, %v110
    %v256 = vadd.f32 %v252, %v255
    %s257 = sld [smem:[#allocation2 + $0x3b]]
    %v258 = vstv %s257
    %v259 = vmul.f32 %v258, %v137
    %v260 = vadd.f32 %v256, %v259
    %s261 = sld [smem:[#allocation2 + $0x3c]]
    %v262 = vstv %s261
    %v263 = vmul.f32 %v262, %v164
    %v264 = vadd.f32 %v260, %v263
    %s265 = sld [smem:[#allocation2 + $0x3d]]
    %v266 = vstv %s265
    %v267 = vmul.f32 %v266, %v191
    %v268 = vadd.f32 %v264, %v267
    %s269 = sld [smem:[#allocation2 + $0x3e]]
    %v270 = vstv %s269
    %v271 = vmul.f32 %v270, %v218
    %v272 = vadd.f32 %v268, %v271
    %s273 = sld [smem:[#allocation2 + $0x3f]]
    %v274 = vstv %s273
    %v275 = vmul.f32 %v274, %v245
    %v276 = vadd.f32 %v272, %v275
    %s277 = sld [smem:[#allocation2 + $0x58]]
    %v278 = vstv %s277
    %v279 = vadd.f32 %v276, %v278
    %v280 = vmax.f32 %v279, 0.0
    %s281 = sld [smem:[#allocation2 + $0x40]]
    %v282 = vstv %s281
    %v283 = vmul.f32 %v282, %v56
    %s284 = sld [smem:[#allocation2 + $0x41]]
    %v285 = vstv %s284
    %v286 = vmul.f32 %v285, %v83
    %v287 = vadd.f32 %v283, %v286
    %s288 = sld [smem:[#allocation2 + $0x42]]
    %v289 = vstv %s288
    %v290 = vmul.f32 %v289, %v110
    %v291 = vadd.f32 %v287, %v290
    %s292 = sld [smem:[#allocation2 + $0x43]]
    %v293 = vstv %s292
    %v294 = vmul.f32 %v293, %v137
    %v295 = vadd.f32 %v291, %v294
    %s296 = sld [smem:[#allocation2 + $0x44]]
    %v297 = vstv %s296
    %v298 = vmul.f32 %v297, %v164
    %v299 = vadd.f32 %v295, %v298
    %s300 = sld [smem:[#allocation2 + $0x45]]
    %v301 = vstv %s300
    %v302 = vmul.f32 %v301, %v191
    %v303 = vadd.f32 %v299, %v302
    %s304 = sld [smem:[#allocation2 + $0x46]]
    %v305 = vstv %s304
    %v306 = vmul.f32 %v305, %v218
    %v307 = vadd.f32 %v303, %v306
    %s308 = sld [smem:[#allocation2 + $0x47]]
    %v309 = vstv %s308
    %v310 = vmul.f32 %v309, %v245
    %v311 = vadd.f32 %v307, %v310
    %s312 = sld [smem:[#allocation2 + $0x59]]
    %v313 = vstv %s312
    %v314 = vadd.f32 %v311, %v313
    %v315 = vmax.f32 %v314, 0.0
    %s316 = sld [smem:[#allocation2 + $0x48]]
    %v317 = vstv %s316
    %v318 = vmul.f32 %v317, %v56
    %s319 = sld [smem:[#allocation2 + $0x49]]
    %v320 = vstv %s319
    %v321 = vmul.f32 %v320, %v83
    %v322 = vadd.f32 %v318, %v321
    %s323 = sld [smem:[#allocation2 + $0x4a]]
    %v324 = vstv %s323
    %v325 = vmul.f32 %v324, %v110
    %v326 = vadd.f32 %v322, %v325
    %s327 = sld [smem:[#allocation2 + $0x4b]]
    %v328 = vstv %s327
    %v329 = vmul.f32 %v328, %v137
    %v330 = vadd.f32 %v326, %v329
    %s331 = sld [smem:[#allocation2 + $0x4c]]
    %v332 = vstv %s331
    %v333 = vmul.f32 %v332, %v164
    %v334 = vadd.f32 %v330, %v333
    %s335 = sld [smem:[#allocation2 + $0x4d]]
    %v336 = vstv %s335
    %v337 = vmul.f32 %v336, %v191
    %v338 = vadd.f32 %v334, %v337
    %s339 = sld [smem:[#allocation2 + $0x4e]]
    %v340 = vstv %s339
    %v341 = vmul.f32 %v340, %v218
    %v342 = vadd.f32 %v338, %v341
    %s343 = sld [smem:[#allocation2 + $0x4f]]
    %v344 = vstv %s343
    %v345 = vmul.f32 %v344, %v245
    %v346 = vadd.f32 %v342, %v345
    %s347 = sld [smem:[#allocation2 + $0x5a]]
    %v348 = vstv %s347
    %v349 = vadd.f32 %v346, %v348
    %v350 = vmax.f32 %v349, 0.0
    %s351 = sld [smem:[#allocation2 + $0x50]]
    %v352 = vstv %s351
    %v353 = vmul.f32 %v352, %v56
    %s354 = sld [smem:[#allocation2 + $0x51]]
    %v355 = vstv %s354
    %v356 = vmul.f32 %v355, %v83
    %v357 = vadd.f32 %v353, %v356
    %s358 = sld [smem:[#allocation2 + $0x52]]
    %v359 = vstv %s358
    %v360 = vmul.f32 %v359, %v110
    %v361 = vadd.f32 %v357, %v360
    %s362 = sld [smem:[#allocation2 + $0x53]]
    %v363 = vstv %s362
    %v364 = vmul.f32 %v363, %v137
    %v365 = vadd.f32 %v361, %v364
    %s366 = sld [smem:[#allocation2 + $0x54]]
    %v367 = vstv %s366
    %v368 = vmul.f32 %v367, %v164
    %v369 = vadd.f32 %v365, %v368
    %s370 = sld [smem:[#allocation2 + $0x55]]
    %v371 = vstv %s370
    %v372 = vmul.f32 %v371, %v191
    %v373 = vadd.f32 %v369, %v372
    %s374 = sld [smem:[#allocation2 + $0x56]]
    %v375 = vstv %s374
    %v376 = vmul.f32 %v375, %v218
    %v377 = vadd.f32 %v373, %v376
    %s378 = sld [smem:[#allocation2 + $0x57]]
    %v379 = vstv %s378
    %v380 = vmul.f32 %v379, %v245
    %v381 = vadd.f32 %v377, %v380
    %s382 = sld [smem:[#allocation2 + $0x5b]]
    %v383 = vstv %s382
    %v384 = vadd.f32 %v381, %v383
    %v385 = vmax.f32 %v384, 0.0
    %s386 = sld [smem:[#allocation2 + $0x5c]]
    %v387 = vstv %s386
    %v388 = vmul.f32 %v387, %v280
    %s389 = sld [smem:[#allocation2 + $0x5d]]
    %v390 = vstv %s389
    %v391 = vmul.f32 %v390, %v315
    %v392 = vadd.f32 %v388, %v391
    %s393 = sld [smem:[#allocation2 + $0x5e]]
    %v394 = vstv %s393
    %v395 = vmul.f32 %v394, %v350
    %v396 = vadd.f32 %v392, %v395
    %s397 = sld [smem:[#allocation2 + $0x5f]]
    %v398 = vstv %s397
    %v399 = vmul.f32 %v398, %v385
    %v400 = vadd.f32 %v396, %v399
    %s401 = sld [smem:[#allocation2 + $0x64]]
    %v402 = vstv %s401
    %v403 = vadd.f32 %v400, %v402
    %v404 = vmax.f32 %v403, 0.0
    %s405 = sld [smem:[#allocation2 + $0x60]]
    %v406 = vstv %s405
    %v407 = vmul.f32 %v406, %v280
    %s408 = sld [smem:[#allocation2 + $0x61]]
    %v409 = vstv %s408
    %v410 = vmul.f32 %v409, %v315
    %v411 = vadd.f32 %v407, %v410
    %s412 = sld [smem:[#allocation2 + $0x62]]
    %v413 = vstv %s412
    %v414 = vmul.f32 %v413, %v350
    %v415 = vadd.f32 %v411, %v414
    %s416 = sld [smem:[#allocation2 + $0x63]]
    %v417 = vstv %s416
    %v418 = vmul.f32 %v417, %v385
    %v419 = vadd.f32 %v415, %v418
    %s420 = sld [smem:[#allocation2 + $0x65]]
    %v421 = vstv %s420
    %v422 = vadd.f32 %v419, %v421
    %v423 = vmax.f32 %v422, 0.0
    %s424 = sld [smem:[#allocation2 + $0x66]]
    %v425 = vstv %s424
    %v426 = vmul.f32 %v425, %v404
    %s427 = sld [smem:[#allocation2 + $0x67]]
    %v428 = vstv %s427
    %v429 = vmul.f32 %v428, %v423
    %v430 = vadd.f32 %v426, %v429
    %s431 = sld [smem:[#allocation2 + $0x6e]]
    %v432 = vstv %s431
    %v433 = vadd.f32 %v430, %v432
    %v434 = vmax.f32 %v433, 0.0
    %s435 = sld [smem:[#allocation2 + $0x68]]
    %v436 = vstv %s435
    %v437 = vmul.f32 %v436, %v404
    %s438 = sld [smem:[#allocation2 + $0x69]]
    %v439 = vstv %s438
    %v440 = vmul.f32 %v439, %v423
    %v441 = vadd.f32 %v437, %v440
    %s442 = sld [smem:[#allocation2 + $0x6f]]
    %v443 = vstv %s442
    %v444 = vadd.f32 %v441, %v443
    %v445 = vmax.f32 %v444, 0.0
    %s446 = sld [smem:[#allocation2 + $0x6a]]
    %v447 = vstv %s446
    %v448 = vmul.f32 %v447, %v404
    %s449 = sld [smem:[#allocation2 + $0x6b]]
    %v450 = vstv %s449
    %v451 = vmul.f32 %v450, %v423
    %v452 = vadd.f32 %v448, %v451
    %s453 = sld [smem:[#allocation2 + $0x70]]
    %v454 = vstv %s453
    %v455 = vadd.f32 %v452, %v454
    %v456 = vmax.f32 %v455, 0.0
    %s457 = sld [smem:[#allocation2 + $0x6c]]
    %v458 = vstv %s457
    %v459 = vmul.f32 %v458, %v404
    %s460 = sld [smem:[#allocation2 + $0x6d]]
    %v461 = vstv %s460
    %v462 = vmul.f32 %v461, %v423
    %v463 = vadd.f32 %v459, %v462
    %s464 = sld [smem:[#allocation2 + $0x71]]
    %v465 = vstv %s464
    %v466 = vadd.f32 %v463, %v465
    %v467 = vmax.f32 %v466, 0.0
    %s468 = sld [smem:[#allocation2 + $0x72]]
    %v469 = vstv %s468
    %v470 = vmul.f32 %v469, %v434
    %s471 = sld [smem:[#allocation2 + $0x73]]
    %v472 = vstv %s471
    %v473 = vmul.f32 %v472, %v445
    %v474 = vadd.f32 %v470, %v473
    %s475 = sld [smem:[#allocation2 + $0x74]]
    %v476 = vstv %s475
    %v477 = vmul.f32 %v476, %v456
    %v478 = vadd.f32 %v474, %v477
    %s479 = sld [smem:[#allocation2 + $0x75]]
    %v480 = vstv %s479
    %v481 = vmul.f32 %v480, %v467
    %v482 = vadd.f32 %v478, %v481
    %s483 = sld [smem:[#allocation2 + $0x92]]
    %v484 = vstv %s483
    %v485 = vadd.f32 %v482, %v484
    %v486 = vmax.f32 %v485, 0.0
    %s487 = sld [smem:[#allocation2 + $0x76]]
    %v488 = vstv %s487
    %v489 = vmul.f32 %v488, %v434
    %s490 = sld [smem:[#allocation2 + $0x77]]
    %v491 = vstv %s490
    %v492 = vmul.f32 %v491, %v445
    %v493 = vadd.f32 %v489, %v492
    %s494 = sld [smem:[#allocation2 + $0x78]]
    %v495 = vstv %s494
    %v496 = vmul.f32 %v495, %v456
    %v497 = vadd.f32 %v493, %v496
    %s498 = sld [smem:[#allocation2 + $0x79]]
    %v499 = vstv %s498
    %v500 = vmul.f32 %v499, %v467
    %v501 = vadd.f32 %v497, %v500
    %s502 = sld [smem:[#allocation2 + $0x93]]
    %v503 = vstv %s502
    %v504 = vadd.f32 %v501, %v503
    %v505 = vmax.f32 %v504, 0.0
    %s506 = sld [smem:[#allocation2 + $0x7a]]
    %v507 = vstv %s506
    %v508 = vmul.f32 %v507, %v434
    %s509 = sld [smem:[#allocation2 + $0x7b]]
    %v510 = vstv %s509
    %v511 = vmul.f32 %v510, %v445
    %v512 = vadd.f32 %v508, %v511
    %s513 = sld [smem:[#allocation2 + $0x7c]]
    %v514 = vstv %s513
    %v515 = vmul.f32 %v514, %v456
    %v516 = vadd.f32 %v512, %v515
    %s517 = sld [smem:[#allocation2 + $0x7d]]
    %v518 = vstv %s517
    %v519 = vmul.f32 %v518, %v467
    %v520 = vadd.f32 %v516, %v519
    %s521 = sld [smem:[#allocation2 + $0x94]]
    %v522 = vstv %s521
    %v523 = vadd.f32 %v520, %v522
    %v524 = vmax.f32 %v523, 0.0
    %s525 = sld [smem:[#allocation2 + $0x7e]]
    %v526 = vstv %s525
    %v527 = vmul.f32 %v526, %v434
    %s528 = sld [smem:[#allocation2 + $0x7f]]
    %v529 = vstv %s528
    %v530 = vmul.f32 %v529, %v445
    %v531 = vadd.f32 %v527, %v530
    %s532 = sld [smem:[#allocation2 + $0x80]]
    %v533 = vstv %s532
    %v534 = vmul.f32 %v533, %v456
    %v535 = vadd.f32 %v531, %v534
    %s536 = sld [smem:[#allocation2 + $0x81]]
    %v537 = vstv %s536
    %v538 = vmul.f32 %v537, %v467
    %v539 = vadd.f32 %v535, %v538
    %s540 = sld [smem:[#allocation2 + $0x95]]
    %v541 = vstv %s540
    %v542 = vadd.f32 %v539, %v541
    %v543 = vmax.f32 %v542, 0.0
    %s544 = sld [smem:[#allocation2 + $0x82]]
    %v545 = vstv %s544
    %v546 = vmul.f32 %v545, %v434
    %s547 = sld [smem:[#allocation2 + $0x83]]
    %v548 = vstv %s547
    %v549 = vmul.f32 %v548, %v445
    %v550 = vadd.f32 %v546, %v549
    %s551 = sld [smem:[#allocation2 + $0x84]]
    %v552 = vstv %s551
    %v553 = vmul.f32 %v552, %v456
    %v554 = vadd.f32 %v550, %v553
    %s555 = sld [smem:[#allocation2 + $0x85]]
    %v556 = vstv %s555
    %v557 = vmul.f32 %v556, %v467
    %v558 = vadd.f32 %v554, %v557
    %s559 = sld [smem:[#allocation2 + $0x96]]
    %v560 = vstv %s559
    %v561 = vadd.f32 %v558, %v560
    %v562 = vmax.f32 %v561, 0.0
    %s563 = sld [smem:[#allocation2 + $0x86]]
    %v564 = vstv %s563
    %v565 = vmul.f32 %v564, %v434
    %s566 = sld [smem:[#allocation2 + $0x87]]
    %v567 = vstv %s566
    %v568 = vmul.f32 %v567, %v445
    %v569 = vadd.f32 %v565, %v568
    %s570 = sld [smem:[#allocation2 + $0x88]]
    %v571 = vstv %s570
    %v572 = vmul.f32 %v571, %v456
    %v573 = vadd.f32 %v569, %v572
    %s574 = sld [smem:[#allocation2 + $0x89]]
    %v575 = vstv %s574
    %v576 = vmul.f32 %v575, %v467
    %v577 = vadd.f32 %v573, %v576
    %s578 = sld [smem:[#allocation2 + $0x97]]
    %v579 = vstv %s578
    %v580 = vadd.f32 %v577, %v579
    %v581 = vmax.f32 %v580, 0.0
    %s582 = sld [smem:[#allocation2 + $0x8a]]
    %v583 = vstv %s582
    %v584 = vmul.f32 %v583, %v434
    %s585 = sld [smem:[#allocation2 + $0x8b]]
    %v586 = vstv %s585
    %v587 = vmul.f32 %v586, %v445
    %v588 = vadd.f32 %v584, %v587
    %s589 = sld [smem:[#allocation2 + $0x8c]]
    %v590 = vstv %s589
    %v591 = vmul.f32 %v590, %v456
    %v592 = vadd.f32 %v588, %v591
    %s593 = sld [smem:[#allocation2 + $0x8d]]
    %v594 = vstv %s593
    %v595 = vmul.f32 %v594, %v467
    %v596 = vadd.f32 %v592, %v595
    %s597 = sld [smem:[#allocation2 + $0x98]]
    %v598 = vstv %s597
    %v599 = vadd.f32 %v596, %v598
    %v600 = vmax.f32 %v599, 0.0
    %s601 = sld [smem:[#allocation2 + $0x8e]]
    %v602 = vstv %s601
    %v603 = vmul.f32 %v602, %v434
    %s604 = sld [smem:[#allocation2 + $0x8f]]
    %v605 = vstv %s604
    %v606 = vmul.f32 %v605, %v445
    %v607 = vadd.f32 %v603, %v606
    %s608 = sld [smem:[#allocation2 + $0x90]]
    %v609 = vstv %s608
    %v610 = vmul.f32 %v609, %v456
    %v611 = vadd.f32 %v607, %v610
    %s612 = sld [smem:[#allocation2 + $0x91]]
    %v613 = vstv %s612
    %v614 = vmul.f32 %v613, %v467
    %v615 = vadd.f32 %v611, %v614
    %s616 = sld [smem:[#allocation2 + $0x99]]
    %v617 = vstv %s616
    %v618 = vadd.f32 %v615, %v617
    %v619 = vmax.f32 %v618, 0.0
    %s620 = sld [smem:[#allocation2 + $0x9a]]
    %v621 = vstv %s620
    %v622 = vmul.f32 %v621, %v486
    %s623 = sld [smem:[#allocation2 + $0x9b]]
    %v624 = vstv %s623
    %v625 = vmul.f32 %v624, %v505
    %v626 = vadd.f32 %v622, %v625
    %s627 = sld [smem:[#allocation2 + $0x9c]]
    %v628 = vstv %s627
    %v629 = vmul.f32 %v628, %v524
    %v630 = vadd.f32 %v626, %v629
    %s631 = sld [smem:[#allocation2 + $0x9d]]
    %v632 = vstv %s631
    %v633 = vmul.f32 %v632, %v543
    %v634 = vadd.f32 %v630, %v633
    %s635 = sld [smem:[#allocation2 + $0x9e]]
    %v636 = vstv %s635
    %v637 = vmul.f32 %v636, %v562
    %v638 = vadd.f32 %v634, %v637
    %s639 = sld [smem:[#allocation2 + $0x9f]]
    %v640 = vstv %s639
    %v641 = vmul.f32 %v640, %v581
    %v642 = vadd.f32 %v638, %v641
    %s643 = sld [smem:[#allocation2 + $0xa0]]
    %v644 = vstv %s643
    %v645 = vmul.f32 %v644, %v600
    %v646 = vadd.f32 %v642, %v645
    %s647 = sld [smem:[#allocation2 + $0xa1]]
    %v648 = vstv %s647
    %v649 = vmul.f32 %v648, %v619
    %v650 = vadd.f32 %v646, %v649
    %s651 = sld [smem:[#allocation2 + $0xca]]
    %v652 = vstv %s651
    %v653 = vadd.f32 %v650, %v652
    %654 = vst [vmem:[%s2] sm:$0x1] %v653
    %s655 = sld [smem:[#allocation2 + $0xa2]]
    %v656 = vstv %s655
    %v657 = vmul.f32 %v656, %v486
    %s658 = sld [smem:[#allocation2 + $0xa3]]
    %v659 = vstv %s658
    %v660 = vmul.f32 %v659, %v505
    %v661 = vadd.f32 %v657, %v660
    %s662 = sld [smem:[#allocation2 + $0xa4]]
    %v663 = vstv %s662
    %v664 = vmul.f32 %v663, %v524
    %v665 = vadd.f32 %v661, %v664
    %s666 = sld [smem:[#allocation2 + $0xa5]]
    %v667 = vstv %s666
    %v668 = vmul.f32 %v667, %v543
    %v669 = vadd.f32 %v665, %v668
    %s670 = sld [smem:[#allocation2 + $0xa6]]
    %v671 = vstv %s670
    %v672 = vmul.f32 %v671, %v562
    %v673 = vadd.f32 %v669, %v672
    %s674 = sld [smem:[#allocation2 + $0xa7]]
    %v675 = vstv %s674
    %v676 = vmul.f32 %v675, %v581
    %v677 = vadd.f32 %v673, %v676
    %s678 = sld [smem:[#allocation2 + $0xa8]]
    %v679 = vstv %s678
    %v680 = vmul.f32 %v679, %v600
    %v681 = vadd.f32 %v677, %v680
    %s682 = sld [smem:[#allocation2 + $0xa9]]
    %v683 = vstv %s682
    %v684 = vmul.f32 %v683, %v619
    %v685 = vadd.f32 %v681, %v684
    %s686 = sld [smem:[#allocation2 + $0xcb]]
    %v687 = vstv %s686
    %v688 = vadd.f32 %v685, %v687
    %s689 = scalar_lea.vmem %s2, 1
    %690 = vst [vmem:[%s689] sm:$0x1] %v688
    %s691 = sld [smem:[#allocation2 + $0xaa]]
    %v692 = vstv %s691
    %v693 = vmul.f32 %v692, %v486
    %s694 = sld [smem:[#allocation2 + $0xab]]
    %v695 = vstv %s694
    %v696 = vmul.f32 %v695, %v505
    %v697 = vadd.f32 %v693, %v696
    %s698 = sld [smem:[#allocation2 + $0xac]]
    %v699 = vstv %s698
    %v700 = vmul.f32 %v699, %v524
    %v701 = vadd.f32 %v697, %v700
    %s702 = sld [smem:[#allocation2 + $0xad]]
    %v703 = vstv %s702
    %v704 = vmul.f32 %v703, %v543
    %v705 = vadd.f32 %v701, %v704
    %s706 = sld [smem:[#allocation2 + $0xae]]
    %v707 = vstv %s706
    %v708 = vmul.f32 %v707, %v562
    %v709 = vadd.f32 %v705, %v708
    %s710 = sld [smem:[#allocation2 + $0xaf]]
    %v711 = vstv %s710
    %v712 = vmul.f32 %v711, %v581
    %v713 = vadd.f32 %v709, %v712
    %s714 = sld [smem:[#allocation2 + $0xb0]]
    %v715 = vstv %s714
    %v716 = vmul.f32 %v715, %v600
    %v717 = vadd.f32 %v713, %v716
    %s718 = sld [smem:[#allocation2 + $0xb1]]
    %v719 = vstv %s718
    %v720 = vmul.f32 %v719, %v619
    %v721 = vadd.f32 %v717, %v720
    %s722 = sld [smem:[#allocation2 + $0xcc]]
    %v723 = vstv %s722
    %v724 = vadd.f32 %v721, %v723
    %s725 = scalar_lea.vmem %s2, 2
    %726 = vst [vmem:[%s725] sm:$0x1] %v724
    %s727 = sld [smem:[#allocation2 + $0xb2]]
    %v728 = vstv %s727
    %v729 = vmul.f32 %v728, %v486
    %s730 = sld [smem:[#allocation2 + $0xb3]]
    %v731 = vstv %s730
    %v732 = vmul.f32 %v731, %v505
    %v733 = vadd.f32 %v729, %v732
    %s734 = sld [smem:[#allocation2 + $0xb4]]
    %v735 = vstv %s734
    %v736 = vmul.f32 %v735, %v524
    %v737 = vadd.f32 %v733, %v736
    %s738 = sld [smem:[#allocation2 + $0xb5]]
    %v739 = vstv %s738
    %v740 = vmul.f32 %v739, %v543
    %v741 = vadd.f32 %v737, %v740
    %s742 = sld [smem:[#allocation2 + $0xb6]]
    %v743 = vstv %s742
    %v744 = vmul.f32 %v743, %v562
    %v745 = vadd.f32 %v741, %v744
    %s746 = sld [smem:[#allocation2 + $0xb7]]
    %v747 = vstv %s746
    %v748 = vmul.f32 %v747, %v581
    %v749 = vadd.f32 %v745, %v748
    %s750 = sld [smem:[#allocation2 + $0xb8]]
    %v751 = vstv %s750
    %v752 = vmul.f32 %v751, %v600
    %v753 = vadd.f32 %v749, %v752
    %s754 = sld [smem:[#allocation2 + $0xb9]]
    %v755 = vstv %s754
    %v756 = vmul.f32 %v755, %v619
    %v757 = vadd.f32 %v753, %v756
    %s758 = sld [smem:[#allocation2 + $0xcd]]
    %v759 = vstv %s758
    %v760 = vadd.f32 %v757, %v759
    %s761 = scalar_lea.vmem %s2, 3
    %762 = vst [vmem:[%s761] sm:$0x1] %v760
    %s763 = sld [smem:[#allocation2 + $0xba]]
    %v764 = vstv %s763
    %v765 = vmul.f32 %v764, %v486
    %s766 = sld [smem:[#allocation2 + $0xbb]]
    %v767 = vstv %s766
    %v768 = vmul.f32 %v767, %v505
    %v769 = vadd.f32 %v765, %v768
    %s770 = sld [smem:[#allocation2 + $0xbc]]
    %v771 = vstv %s770
    %v772 = vmul.f32 %v771, %v524
    %v773 = vadd.f32 %v769, %v772
    %s774 = sld [smem:[#allocation2 + $0xbd]]
    %v775 = vstv %s774
    %v776 = vmul.f32 %v775, %v543
    %v777 = vadd.f32 %v773, %v776
    %s778 = sld [smem:[#allocation2 + $0xbe]]
    %v779 = vstv %s778
    %v780 = vmul.f32 %v779, %v562
    %v781 = vadd.f32 %v777, %v780
    %s782 = sld [smem:[#allocation2 + $0xbf]]
    %v783 = vstv %s782
    %v784 = vmul.f32 %v783, %v581
    %v785 = vadd.f32 %v781, %v784
    %s786 = sld [smem:[#allocation2 + $0xc0]]
    %v787 = vstv %s786
    %v788 = vmul.f32 %v787, %v600
    %v789 = vadd.f32 %v785, %v788
    %s790 = sld [smem:[#allocation2 + $0xc1]]
    %v791 = vstv %s790
    %v792 = vmul.f32 %v791, %v619
    %v793 = vadd.f32 %v789, %v792
    %s794 = sld [smem:[#allocation2 + $0xce]]
    %v795 = vstv %s794
    %v796 = vadd.f32 %v793, %v795
    %s797 = scalar_lea.vmem %s2, 4
    %798 = vst [vmem:[%s797] sm:$0x1] %v796
    %s799 = sld [smem:[#allocation2 + $0xc2]]
    %v800 = vstv %s799
    %v801 = vmul.f32 %v800, %v486
    %s802 = sld [smem:[#allocation2 + $0xc3]]
    %v803 = vstv %s802
    %v804 = vmul.f32 %v803, %v505
    %v805 = vadd.f32 %v801, %v804
    %s806 = sld [smem:[#allocation2 + $0xc4]]
    %v807 = vstv %s806
    %v808 = vmul.f32 %v807, %v524
    %v809 = vadd.f32 %v805, %v808
    %s810 = sld [smem:[#allocation2 + $0xc5]]
    %v811 = vstv %s810
    %v812 = vmul.f32 %v811, %v543
    %v813 = vadd.f32 %v809, %v812
    %s814 = sld [smem:[#allocation2 + $0xc6]]
    %v815 = vstv %s814
    %v816 = vmul.f32 %v815, %v562
    %v817 = vadd.f32 %v813, %v816
    %s818 = sld [smem:[#allocation2 + $0xc7]]
    %v819 = vstv %s818
    %v820 = vmul.f32 %v819, %v581
    %v821 = vadd.f32 %v817, %v820
    %s822 = sld [smem:[#allocation2 + $0xc8]]
    %v823 = vstv %s822
    %v824 = vmul.f32 %v823, %v600
    %v825 = vadd.f32 %v821, %v824
    %s826 = sld [smem:[#allocation2 + $0xc9]]
    %v827 = vstv %s826
    %v828 = vmul.f32 %v827, %v619
    %v829 = vadd.f32 %v825, %v828
    %s830 = sld [smem:[#allocation2 + $0xcf]]
    %v831 = vstv %s830
    %v832 = vadd.f32 %v829, %v831
    %s833 = scalar_lea.vmem %s2, 5
    %834 = vst [vmem:[%s833] sm:$0x1] %v832
    // Predicated region
    $region14: #{improved_autoencoder.1} parent=1 // pred_check
      _
    $region15: #{improved_autoencoder.1} parent=1 // pred_check_branch
      %836 = sbr.rel (0) target = $region17
    $region16: #{improved_autoencoder.1} parent=1 // pred_region
      _
    $region17: #{improved_autoencoder.1} parent=1 // pred_fallthru
      _
    // Predicated region
    $region18: #{improved_autoencoder.1} parent=1 // pred_check
      _
    $region19: #{improved_autoencoder.1} parent=1 // pred_check_branch
      %838 = sbr.rel (0) target = $region21
    $region20: #{improved_autoencoder.1} parent=1 // pred_region
      _
    $region21: #{improved_autoencoder.1} parent=1 // pred_fallthru
      _
    %839 = vsyncpa [#allocation3], 1

</llo_original>
